<compile_context>
chip_gen: v7x
topology: tpu7x:2x2x1
jax: 0.10.0
libtpu: 0.0.40
codegen_flags: <defaults>
</compile_context>

<pallas_src>
import functools
import numpy as np
import jax
import jax.numpy as jnp
from jax.experimental import pallas as pl
from jax.experimental.pallas import tpu as pltpu

# ----------------------------- configuration --------------------------------
N = 2            # batch
NUM_PTS = 32     # points in the cloud
DIMS = 3         # spatial dims
C_IN = 8         # input feature channels
C_OUT = 16       # output feature channels
K = 4            # neighbors
D = 1            # dilation / spread
P = 8            # representative points

C_HALF = C_OUT // 2                          # PointCNN.dense output = XConv C_in
C_MID = C_OUT // 4                           # C_in != 0  ->  C_out // 4
DM = min(int(np.ceil(C_OUT / C_IN)), 4)      # depth_multiplier = 2
CC = C_MID + C_HALF                          # concat channels inside XConv
KK = K * K
R = N * P                                    # all representative points (one tile)
OUT_LANES = 128                              # lane-dense output width

BN_SCALE = float(1.0 / np.sqrt(1.0 + 1e-5))  # eval-mode BatchNorm, default stats
F32 = jnp.float32


def _mm(a, b):
    # Single-pass MXU matmul: bf16 operands, f32 accumulation.
    return jnp.dot(a.astype(jnp.bfloat16), b.astype(jnp.bfloat16),
                   preferred_element_type=jnp.float32)


# --------------------------- weight-slab layout ------------------------------
def _pad8(r):
    return ((r + 7) // 8) * 8


_SLAB_SPECS = [
    ("wpre", C_IN), ("bpre", 1),
    ("w1", DIMS), ("b1", 1),
    ("w2", C_MID), ("b2", 1),
    ("wc", K * DIMS), ("bc", 1),
    ("wt1", KK), ("bt1", 1),
    ("wt2", KK), ("bt2", 1),
    ("wdw_l", DM * K), ("wdw_f", DM * K),
    ("bdw_l", DM), ("bdw_f", DM),
]
for _m in range(DM):
    _SLAB_SPECS += [("wp%d_l" % _m, C_MID), ("wp%d_f" % _m, C_HALF)]

SLAB_OFF = {}
_r = 0
for _name, _rows in _SLAB_SPECS:
    SLAB_OFF[_name] = _r
    _r += _pad8(_rows)
SLAB_ROWS = _pad8(_r)
SLAB_COLS = OUT_LANES


def build_weight_slab(p):
    """Pack all weights/biases (BN scale folded in) into one (rows, 128) slab."""
    s = BN_SCALE
    wdw = jnp.transpose(p["Wdw"].reshape(CC, DM, K), (1, 2, 0)).reshape(DM * K, CC)
    bdw = p["bdw"].reshape(CC, DM).T                                    # (DM, CC)
    wp = jnp.transpose(p["Wp"].reshape(C_OUT, CC, DM), (2, 1, 0)) * s   # (DM, CC, C_OUT)

    entries = {
        "wpre": p["Wpre"].T * s, "bpre": (p["bpre"] * s)[None, :],
        "w1": p["W1"].T * s,     "b1": (p["b1"] * s)[None, :],
        "w2": p["W2"].T * s,     "b2": (p["b2"] * s)[None, :],
        "wc": jnp.transpose(p["Wc"], (2, 1, 0)).reshape(K * DIMS, KK),
        "bc": p["bc"][None, :],
        "wt1": p["Wt1"].T, "bt1": p["bt1"][None, :],
        "wt2": p["Wt2"].T, "bt2": p["bt2"][None, :],
        "wdw_l": wdw[:, :C_MID], "wdw_f": wdw[:, C_MID:],
        "bdw_l": bdw[:, :C_MID], "bdw_f": bdw[:, C_MID:],
    }
    for m in range(DM):
        entries["wp%d_l" % m] = wp[m, :C_MID, :]     # lanes >= C_OUT stay zero
        entries["wp%d_f" % m] = wp[m, C_MID:, :]

    slab = jnp.zeros((SLAB_ROWS, SLAB_COLS), jnp.float32)
    for name, _rows in _SLAB_SPECS:
        blk = entries[name].astype(jnp.float32)
        r0 = SLAB_OFF[name]
        slab = slab.at[r0:r0 + blk.shape[0], :blk.shape[1]].set(blk)
    return slab


# ------------------------- fused PointCNN / XConv kernel ---------------------
def xconv_kernel(plc_km_ref, plc_pm_ref, fgath_ref, slab_ref, out_ref):
    def W(name, rows, cols):
        r0 = SLAB_OFF[name]
        return slab_ref[r0:r0 + rows, 0:cols]

    plc_km = plc_km_ref[...]          # (K*R, DIMS)  neighbor-major local coords
    plc_pm = plc_pm_ref[...]          # (R, K*DIMS)  point-major local coords
    fgath = fgath_ref[...]            # (K*R, C_IN)  gathered raw input features

    # PointCNN.dense fused in: Dense(C_in -> C_out//2), ReLU, eval-BN (folded).
    fpre = jnp.maximum(_mm(fgath, W("wpre", C_IN, C_HALF)) + W("bpre", 1, C_HALF), 0.0)

    # XConv lifting MLP dense1/dense2 over all K neighbors in one matmul each.
    h1 = jnp.maximum(_mm(plc_km, W("w1", DIMS, C_MID)) + W("b1", 1, C_MID), 0.0)
    h2 = jnp.maximum(_mm(h1, W("w2", C_MID, C_MID)) + W("b2", 1, C_MID), 0.0)

    # X-transform: Conv over (d,k) as one matmul, then two Dense layers.
    x0 = jnp.maximum(_mm(plc_pm, W("wc", K * DIMS, KK)) + W("bc", 1, KK), 0.0)
    x1 = jnp.maximum(_mm(x0, W("wt1", KK, KK)) + W("bt1", 1, KK), 0.0)
    x2 = _mm(x1, W("wt2", KK, KK)) + W("bt2", 1, KK)   # (R, K*K); X[r,i,j]=x2[r,i*K+j]

    # fts_X[:, i, :] = sum_j X[:, i, j] * fcat[neighbor j]; lifted / fts halves
    # kept split (all reads start at lane 0), X column broadcast reused.
    fX_l, fX_f = [], []
    for i in range(K):
        col0 = x2[:, i * K:i * K + 1]                  # (R, 1) lane-broadcast
        al = col0 * h2[0:R, :]
        af = col0 * fpre[0:R, :]
        for j in range(1, K):
            col = x2[:, i * K + j:i * K + j + 1]
            al = al + col * h2[j * R:(j + 1) * R, :]
            af = af + col * fpre[j * R:(j + 1) * R, :]
        fX_l.append(al)
        fX_f.append(af)

    # end_conv SepConv: depthwise (1,K) over neighbors, 1x1 pointwise, ReLU, BN.
    wdl = W("wdw_l", DM * K, C_MID)
    wdf = W("wdw_f", DM * K, C_HALF)
    bdl = W("bdw_l", DM, C_MID)
    bdf = W("bdw_f", DM, C_HALF)
    out_parts = []
    for m in range(DM):
        dwl = bdl[m:m + 1, :]
        dwf = bdf[m:m + 1, :]
        for i in range(K):
            dwl = dwl + wdl[m * K + i:m * K + i + 1, :] * fX_l[i]
            dwf = dwf + wdf[m * K + i:m * K + i + 1, :] * fX_f[i]
        out_parts.append(_mm(dwl, W("wp%d_l" % m, C_MID, OUT_LANES)))
        out_parts.append(_mm(dwf, W("wp%d_f" % m, C_HALF, OUT_LANES)))
    out_acc = out_parts[0]
    for part in out_parts[1:]:
        out_acc = out_acc + part

    # ReLU; BN scale folded into Wp. Full-width (lane-dense, unmasked) store.
    out_ref[...] = jnp.maximum(out_acc, 0.0)


# ----------------------------- plain-JAX glue --------------------------------
def knn_indices(rep_pts, pts):
    # equivalent of knn_indices_func: k-NN excluding self, dilated by D
    d2 = jnp.sum((rep_pts[:, :, None, :] - pts[:, None, :, :]) ** 2, axis=-1)
    order = jnp.argsort(d2, axis=-1)
    return order[:, :, 1:K * D + 1:D]                            # (N, P, K)


def select_region(arr, idx):
    return jax.vmap(lambda a, i: a[i])(arr, idx)                 # (N, P, K, C)


def pointcnn_forward(rep_pts, pts, fts, params):
    # k-NN neighborhoods (r_indices_func equivalent) + gather, in plain JAX.
    # TODO(synk): at realistic sizes move this gather into the kernel via
    # scalar-prefetched indices instead of materializing (N,P,K,*) tensors.
    idx = knn_indices(rep_pts, pts)                              # (N, P, K)
    preg = select_region(pts, idx)                               # (N, P, K, DIMS)
    freg = select_region(fts, idx)                               # (N, P, K, C_IN)
    plc = preg - rep_pts[:, :, None, :]                          # local coordinates

    plc_km = jnp.transpose(plc, (2, 0, 1, 3)).reshape(K * R, DIMS)
    plc_pm = plc.reshape(R, K * DIMS)
    fgath_km = jnp.transpose(freg, (2, 0, 1, 3)).reshape(K * R, C_IN)
    slab = build_weight_slab(params)

    out = pl.pallas_call(
        xconv_kernel,
        out_shape=jax.ShapeDtypeStruct((R, OUT_LANES), jnp.float32),
        grid_spec=pltpu.PrefetchScalarGridSpec(
            num_scalar_prefetch=0,
            grid=(1,),
            in_specs=[
                pl.BlockSpec((K * R, DIMS), lambda i: (0, 0)),
                pl.BlockSpec((R, K * DIMS), lambda i: (0, 0)),
                pl.BlockSpec((K * R, C_IN), lambda i: (0, 0)),
                pl.BlockSpec((SLAB_ROWS, SLAB_COLS), lambda i: (0, 0)),
            ],
            out_specs=pl.BlockSpec((R, OUT_LANES), lambda i: (0, 0)),
        ),
        compiler_params=pltpu.CompilerParams(
            dimension_semantics=("arbitrary",)),
    )(plc_km, plc_pm, fgath_km, slab)

    return out[:, :C_OUT].reshape(N, P, C_OUT)


# --------------------------- pure-JAX reference -------------------------------
def reference_forward(rep_pts, pts, fts, params):
    relu = lambda v: jnp.maximum(v, 0.0)
    bf = lambda a: a.astype(jnp.bfloat16)
    # Matmul stages mirror the kernel's precision policy (bf16 operands, f32
    # accumulation). The eval-mode BN scale is folded into the weights; this is
    # exact since the scale is positive and commutes with ReLU.
    mm = lambda eq, a, b: jnp.einsum(eq, bf(a), bf(b),
                                     preferred_element_type=jnp.float32)
    hp = functools.partial(jnp.einsum, precision=jax.lax.Precision.HIGHEST)
    s = BN_SCALE

    f = relu(mm('bnc,oc->bno', fts, params["Wpre"] * s) + params["bpre"] * s)
    idx = knn_indices(rep_pts, pts)
    preg = select_region(pts, idx)
    freg = select_region(f, idx)
    plc = preg - rep_pts[:, :, None, :]
    h1 = relu(mm('npkd,md->npkm', plc, params["W1"] * s) + params["b1"] * s)
    h2 = relu(mm('npkm,qm->npkq', h1, params["W2"] * s) + params["b2"] * s)
    fcat = jnp.concatenate([h2, freg], axis=-1)                  # (N, P, K, CC)
    x0 = relu(mm('npkd,odk->npo', plc, params["Wc"]) + params["bc"])
    x1 = relu(mm('npq,oq->npo', x0, params["Wt1"]) + params["bt1"])
    x2 = mm('npq,oq->npo', x1, params["Wt2"]) + params["bt2"]
    X = x2.reshape(N, P, K, K)
    fX = hp('npij,npjc->npic', X, fcat)                          # (N, P, K, CC)
    Wd3 = params["Wdw"].reshape(CC, DM, K)
    dw = hp('npkc,cmk->npcm', fX, Wd3).reshape(N, P, CC * DM) + params["bdw"]
    return relu(mm('npq,oq->npo', dw, params["Wp"] * s))


# ------------------------------- parameters ----------------------------------
def init_params(key):
    ks = jax.random.split(key, 15)
    g = lambda k, shape: 0.1 * jax.random.normal(k, shape, dtype=jnp.float32)
    return {
        "Wpre": g(ks[0], (C_HALF, C_IN)),   "bpre": g(ks[1], (C_HALF,)),
        "W1":   g(ks[2], (C_MID, DIMS)),    "b1":   g(ks[3], (C_MID,)),
        "W2":   g(ks[4], (C_MID, C_MID)),   "b2":   g(ks[5], (C_MID,)),
        "Wc":   g(ks[6], (KK, DIMS, K)),    "bc":   g(ks[7], (KK,)),
        "Wt1":  g(ks[8], (KK, KK)),         "bt1":  g(ks[9], (KK,)),
        "Wt2":  g(ks[10], (KK, KK)),        "bt2":  g(ks[11], (KK,)),
        "Wdw":  g(ks[12], (CC * DM, K)),    "bdw":  g(ks[13], (CC * DM,)),
        "Wp":   g(ks[14], (C_OUT, CC * DM)),
    }


if __name__ == "__main__":
    key = jax.random.PRNGKey(0)
    kp, kx, kf = jax.random.split(key, 3)
    params = init_params(kp)
    pts = jax.random.normal(kx, (N, NUM_PTS, DIMS), dtype=jnp.float32)
    fts = jax.random.normal(kf, (N, NUM_PTS, C_IN), dtype=jnp.float32)
    rep_pts = pts[:, :P, :]          # 3-tuple path: representative points supplied

    forward = jax.jit(pointcnn_forward)
    out = jax.block_until_ready(forward(rep_pts, pts, fts, params))

    ref = reference_forward(rep_pts, pts, fts, params)
    assert out.shape == (N, P, C_OUT), out.shape
    err = float(jnp.max(jnp.abs(out - ref)))
    assert err < 1e-3, f"max abs err {err}"
    print("KERNEL_OK")
</pallas_src>

<mosaic_0001>
module attributes {stable_mosaic.version = 11 : i64} {
  func.func @xconv_kernel(%arg0: i32, %arg1: memref<64x3xf32, #tpu.memory_space<vmem>>, %arg2: memref<16x12xf32, #tpu.memory_space<vmem>>, %arg3: memref<64x8xf32, #tpu.memory_space<vmem>>, %arg4: memref<184x128xf32, #tpu.memory_space<vmem>>, %arg5: memref<16x128xf32, #tpu.memory_space<vmem>>) attributes {dimension_semantics = [#tpu.dimension_semantics<arbitrary>], iteration_bounds = array<i64: 1>, scalar_prefetch = 0 : i64, scratch_operands = 0 : i64, tpu.core_type = #tpu.core_type<tc>, window_params = [{pipeline_mode = #tpu.pipeline_mode<synchronous>, transform_indices = @transform_0, window_bounds = array<i64: 64, 3>}, {pipeline_mode = #tpu.pipeline_mode<synchronous>, transform_indices = @transform_1, window_bounds = array<i64: 16, 12>}, {pipeline_mode = #tpu.pipeline_mode<synchronous>, transform_indices = @transform_2, window_bounds = array<i64: 64, 8>}, {pipeline_mode = #tpu.pipeline_mode<synchronous>, transform_indices = @transform_3, window_bounds = array<i64: 184, 128>}, {pipeline_mode = #tpu.pipeline_mode<synchronous>, transform_indices = @transform_4, window_bounds = array<i64: 16, 128>}]} {
    %c0 = arith.constant 0 : index
    %c0_0 = arith.constant 0 : index
    %0 = vector.load %arg1[%c0, %c0_0] : memref<64x3xf32, #tpu.memory_space<vmem>>, vector<64x3xf32>
    %c0_1 = arith.constant 0 : index
    %c0_2 = arith.constant 0 : index
    %1 = vector.load %arg2[%c0_1, %c0_2] : memref<16x12xf32, #tpu.memory_space<vmem>>, vector<16x12xf32>
    %c0_3 = arith.constant 0 : index
    %c0_4 = arith.constant 0 : index
    %2 = vector.load %arg3[%c0_3, %c0_4] : memref<64x8xf32, #tpu.memory_space<vmem>>, vector<64x8xf32>
    %c0_5 = arith.constant 0 : index
    %c0_6 = arith.constant 0 : index
    %3 = vector.load %arg4[%c0_5, %c0_6] : memref<184x128xf32, #tpu.memory_space<vmem>>, vector<8x8xf32>
    %4 = arith.truncf %2 : vector<64x8xf32> to vector<64x8xbf16>
    %5 = arith.truncf %3 : vector<8x8xf32> to vector<8x8xbf16>
    %cst = arith.constant dense<0.000000e+00> : vector<64x8xf32>
    %6 = tpu.matmul %4, %5, %cst {dimension_numbers = #tpu.dot_dimension_numbers<[1], [0], [0], [1], [0, 0, 1, 1], [], []>} : vector<64x8xbf16>, vector<8x8xbf16>, vector<64x8xf32> -> vector<64x8xf32>
    %c8 = arith.constant 8 : index
    %c0_7 = arith.constant 0 : index
    %7 = vector.load %arg4[%c8, %c0_7] : memref<184x128xf32, #tpu.memory_space<vmem>>, vector<1x8xf32>
    %8 = vector.broadcast %7 : vector<1x8xf32> to vector<64x8xf32>
    %9 = arith.addf %6, %8 : vector<64x8xf32>
    %cst_8 = arith.constant 0.000000e+00 : f32
    %10 = vector.broadcast %cst_8 : f32 to vector<64x8xf32>
    %11 = arith.maximumf %9, %10 : vector<64x8xf32>
    %c16 = arith.constant 16 : index
    %c0_9 = arith.constant 0 : index
    %12 = vector.load %arg4[%c16, %c0_9] : memref<184x128xf32, #tpu.memory_space<vmem>>, vector<3x4xf32>
    %13 = arith.truncf %0 : vector<64x3xf32> to vector<64x3xbf16>
    %14 = arith.truncf %12 : vector<3x4xf32> to vector<3x4xbf16>
    %cst_10 = arith.constant dense<0.000000e+00> : vector<64x4xf32>
    %15 = tpu.matmul %13, %14, %cst_10 {dimension_numbers = #tpu.dot_dimension_numbers<[1], [0], [0], [1], [0, 0, 1, 1], [], []>} : vector<64x3xbf16>, vector<3x4xbf16>, vector<64x4xf32> -> vector<64x4xf32>
    %c24 = arith.constant 24 : index
    %c0_11 = arith.constant 0 : index
    %16 = vector.load %arg4[%c24, %c0_11] : memref<184x128xf32, #tpu.memory_space<vmem>>, vector<1x4xf32>
    %17 = vector.broadcast %16 : vector<1x4xf32> to vector<64x4xf32>
    %18 = arith.addf %15, %17 : vector<64x4xf32>
    %cst_12 = arith.constant 0.000000e+00 : f32
    %19 = vector.broadcast %cst_12 : f32 to vector<64x4xf32>
    %20 = arith.maximumf %18, %19 : vector<64x4xf32>
    %c32 = arith.constant 32 : index
    %c0_13 = arith.constant 0 : index
    %21 = vector.load %arg4[%c32, %c0_13] : memref<184x128xf32, #tpu.memory_space<vmem>>, vector<4x4xf32>
    %22 = arith.truncf %20 : vector<64x4xf32> to vector<64x4xbf16>
    %23 = arith.truncf %21 : vector<4x4xf32> to vector<4x4xbf16>
    %cst_14 = arith.constant dense<0.000000e+00> : vector<64x4xf32>
    %24 = tpu.matmul %22, %23, %cst_14 {dimension_numbers = #tpu.dot_dimension_numbers<[1], [0], [0], [1], [0, 0, 1, 1], [], []>} : vector<64x4xbf16>, vector<4x4xbf16>, vector<64x4xf32> -> vector<64x4xf32>
    %c40 = arith.constant 40 : index
    %c0_15 = arith.constant 0 : index
    %25 = vector.load %arg4[%c40, %c0_15] : memref<184x128xf32, #tpu.memory_space<vmem>>, vector<1x4xf32>
    %26 = vector.broadcast %25 : vector<1x4xf32> to vector<64x4xf32>
    %27 = arith.addf %24, %26 : vector<64x4xf32>
    %cst_16 = arith.constant 0.000000e+00 : f32
    %28 = vector.broadcast %cst_16 : f32 to vector<64x4xf32>
    %29 = arith.maximumf %27, %28 : vector<64x4xf32>
    %c48 = arith.constant 48 : index
    %c0_17 = arith.constant 0 : index
    %30 = vector.load %arg4[%c48, %c0_17] : memref<184x128xf32, #tpu.memory_space<vmem>>, vector<12x16xf32>
    %31 = arith.truncf %1 : vector<16x12xf32> to vector<16x12xbf16>
    %32 = arith.truncf %30 : vector<12x16xf32> to vector<12x16xbf16>
    %cst_18 = arith.constant dense<0.000000e+00> : vector<16x16xf32>
    %33 = tpu.matmul %31, %32, %cst_18 {dimension_numbers = #tpu.dot_dimension_numbers<[1], [0], [0], [1], [0, 0, 1, 1], [], []>} : vector<16x12xbf16>, vector<12x16xbf16>, vector<16x16xf32> -> vector<16x16xf32>
    %c64 = arith.constant 64 : index
    %c0_19 = arith.constant 0 : index
    %34 = vector.load %arg4[%c64, %c0_19] : memref<184x128xf32, #tpu.memory_space<vmem>>, vector<1x16xf32>
    %35 = vector.broadcast %34 : vector<1x16xf32> to vector<16x16xf32>
    %36 = arith.addf %33, %35 : vector<16x16xf32>
    %cst_20 = arith.constant 0.000000e+00 : f32
    %37 = vector.broadcast %cst_20 : f32 to vector<16x16xf32>
    %38 = arith.maximumf %36, %37 : vector<16x16xf32>
    %c72 = arith.constant 72 : index
    %c0_21 = arith.constant 0 : index
    %39 = vector.load %arg4[%c72, %c0_21] : memref<184x128xf32, #tpu.memory_space<vmem>>, vector<16x16xf32>
    %40 = arith.truncf %38 : vector<16x16xf32> to vector<16x16xbf16>
    %41 = arith.truncf %39 : vector<16x16xf32> to vector<16x16xbf16>
    %cst_22 = arith.constant dense<0.000000e+00> : vector<16x16xf32>
    %42 = tpu.matmul %40, %41, %cst_22 {dimension_numbers = #tpu.dot_dimension_numbers<[1], [0], [0], [1], [0, 0, 1, 1], [], []>} : vector<16x16xbf16>, vector<16x16xbf16>, vector<16x16xf32> -> vector<16x16xf32>
    %c88 = arith.constant 88 : index
    %c0_23 = arith.constant 0 : index
    %43 = vector.load %arg4[%c88, %c0_23] : memref<184x128xf32, #tpu.memory_space<vmem>>, vector<1x16xf32>
    %44 = vector.broadcast %43 : vector<1x16xf32> to vector<16x16xf32>
    %45 = arith.addf %42, %44 : vector<16x16xf32>
    %cst_24 = arith.constant 0.000000e+00 : f32
    %46 = vector.broadcast %cst_24 : f32 to vector<16x16xf32>
    %47 = arith.maximumf %45, %46 : vector<16x16xf32>
    %c96 = arith.constant 96 : index
    %c0_25 = arith.constant 0 : index
    %48 = vector.load %arg4[%c96, %c0_25] : memref<184x128xf32, #tpu.memory_space<vmem>>, vector<16x16xf32>
    %49 = arith.truncf %47 : vector<16x16xf32> to vector<16x16xbf16>
    %50 = arith.truncf %48 : vector<16x16xf32> to vector<16x16xbf16>
    %cst_26 = arith.constant dense<0.000000e+00> : vector<16x16xf32>
    %51 = tpu.matmul %49, %50, %cst_26 {dimension_numbers = #tpu.dot_dimension_numbers<[1], [0], [0], [1], [0, 0, 1, 1], [], []>} : vector<16x16xbf16>, vector<16x16xbf16>, vector<16x16xf32> -> vector<16x16xf32>
    %c112 = arith.constant 112 : index
    %c0_27 = arith.constant 0 : index
    %52 = vector.load %arg4[%c112, %c0_27] : memref<184x128xf32, #tpu.memory_space<vmem>>, vector<1x16xf32>
    %53 = vector.broadcast %52 : vector<1x16xf32> to vector<16x16xf32>
    %54 = arith.addf %51, %53 : vector<16x16xf32>
    %55 = vector.extract_strided_slice %54 {offsets = [0, 0], sizes = [16, 1], strides = [1, 1]} : vector<16x16xf32> to vector<16x1xf32>
    %56 = vector.extract_strided_slice %29 {offsets = [0, 0], sizes = [16, 4], strides = [1, 1]} : vector<64x4xf32> to vector<16x4xf32>
    %57 = vector.broadcast %55 : vector<16x1xf32> to vector<16x4xf32>
    %58 = arith.mulf %57, %56 : vector<16x4xf32>
    %59 = vector.extract_strided_slice %11 {offsets = [0, 0], sizes = [16, 8], strides = [1, 1]} : vector<64x8xf32> to vector<16x8xf32>
    %60 = vector.broadcast %55 : vector<16x1xf32> to vector<16x8xf32>
    %61 = arith.mulf %60, %59 : vector<16x8xf32>
    %62 = vector.extract_strided_slice %54 {offsets = [0, 1], sizes = [16, 1], strides = [1, 1]} : vector<16x16xf32> to vector<16x1xf32>
    %63 = vector.extract_strided_slice %29 {offsets = [16, 0], sizes = [16, 4], strides = [1, 1]} : vector<64x4xf32> to vector<16x4xf32>
    %64 = vector.broadcast %62 : vector<16x1xf32> to vector<16x4xf32>
    %65 = arith.mulf %64, %63 : vector<16x4xf32>
    %66 = arith.addf %58, %65 : vector<16x4xf32>
    %67 = vector.extract_strided_slice %11 {offsets = [16, 0], sizes = [16, 8], strides = [1, 1]} : vector<64x8xf32> to vector<16x8xf32>
    %68 = vector.broadcast %62 : vector<16x1xf32> to vector<16x8xf32>
    %69 = arith.mulf %68, %67 : vector<16x8xf32>
    %70 = arith.addf %61, %69 : vector<16x8xf32>
    %71 = vector.extract_strided_slice %54 {offsets = [0, 2], sizes = [16, 1], strides = [1, 1]} : vector<16x16xf32> to vector<16x1xf32>
    %72 = vector.extract_strided_slice %29 {offsets = [32, 0], sizes = [16, 4], strides = [1, 1]} : vector<64x4xf32> to vector<16x4xf32>
    %73 = vector.broadcast %71 : vector<16x1xf32> to vector<16x4xf32>
    %74 = arith.mulf %73, %72 : vector<16x4xf32>
    %75 = arith.addf %66, %74 : vector<16x4xf32>
    %76 = vector.extract_strided_slice %11 {offsets = [32, 0], sizes = [16, 8], strides = [1, 1]} : vector<64x8xf32> to vector<16x8xf32>
    %77 = vector.broadcast %71 : vector<16x1xf32> to vector<16x8xf32>
    %78 = arith.mulf %77, %76 : vector<16x8xf32>
    %79 = arith.addf %70, %78 : vector<16x8xf32>
    %80 = vector.extract_strided_slice %54 {offsets = [0, 3], sizes = [16, 1], strides = [1, 1]} : vector<16x16xf32> to vector<16x1xf32>
    %81 = vector.extract_strided_slice %29 {offsets = [48, 0], sizes = [16, 4], strides = [1, 1]} : vector<64x4xf32> to vector<16x4xf32>
    %82 = vector.broadcast %80 : vector<16x1xf32> to vector<16x4xf32>
    %83 = arith.mulf %82, %81 : vector<16x4xf32>
    %84 = arith.addf %75, %83 : vector<16x4xf32>
    %85 = vector.extract_strided_slice %11 {offsets = [48, 0], sizes = [16, 8], strides = [1, 1]} : vector<64x8xf32> to vector<16x8xf32>
    %86 = vector.broadcast %80 : vector<16x1xf32> to vector<16x8xf32>
    %87 = arith.mulf %86, %85 : vector<16x8xf32>
    %88 = arith.addf %79, %87 : vector<16x8xf32>
    %89 = vector.extract_strided_slice %54 {offsets = [0, 4], sizes = [16, 1], strides = [1, 1]} : vector<16x16xf32> to vector<16x1xf32>
    %90 = vector.extract_strided_slice %29 {offsets = [0, 0], sizes = [16, 4], strides = [1, 1]} : vector<64x4xf32> to vector<16x4xf32>
    %91 = vector.broadcast %89 : vector<16x1xf32> to vector<16x4xf32>
    %92 = arith.mulf %91, %90 : vector<16x4xf32>
    %93 = vector.extract_strided_slice %11 {offsets = [0, 0], sizes = [16, 8], strides = [1, 1]} : vector<64x8xf32> to vector<16x8xf32>
    %94 = vector.broadcast %89 : vector<16x1xf32> to vector<16x8xf32>
    %95 = arith.mulf %94, %93 : vector<16x8xf32>
    %96 = vector.extract_strided_slice %54 {offsets = [0, 5], sizes = [16, 1], strides = [1, 1]} : vector<16x16xf32> to vector<16x1xf32>
    %97 = vector.extract_strided_slice %29 {offsets = [16, 0], sizes = [16, 4], strides = [1, 1]} : vector<64x4xf32> to vector<16x4xf32>
    %98 = vector.broadcast %96 : vector<16x1xf32> to vector<16x4xf32>
    %99 = arith.mulf %98, %97 : vector<16x4xf32>
    %100 = arith.addf %92, %99 : vector<16x4xf32>
    %101 = vector.extract_strided_slice %11 {offsets = [16, 0], sizes = [16, 8], strides = [1, 1]} : vector<64x8xf32> to vector<16x8xf32>
    %102 = vector.broadcast %96 : vector<16x1xf32> to vector<16x8xf32>
    %103 = arith.mulf %102, %101 : vector<16x8xf32>
    %104 = arith.addf %95, %103 : vector<16x8xf32>
    %105 = vector.extract_strided_slice %54 {offsets = [0, 6], sizes = [16, 1], strides = [1, 1]} : vector<16x16xf32> to vector<16x1xf32>
    %106 = vector.extract_strided_slice %29 {offsets = [32, 0], sizes = [16, 4], strides = [1, 1]} : vector<64x4xf32> to vector<16x4xf32>
    %107 = vector.broadcast %105 : vector<16x1xf32> to vector<16x4xf32>
    %108 = arith.mulf %107, %106 : vector<16x4xf32>
    %109 = arith.addf %100, %108 : vector<16x4xf32>
    %110 = vector.extract_strided_slice %11 {offsets = [32, 0], sizes = [16, 8], strides = [1, 1]} : vector<64x8xf32> to vector<16x8xf32>
    %111 = vector.broadcast %105 : vector<16x1xf32> to vector<16x8xf32>
    %112 = arith.mulf %111, %110 : vector<16x8xf32>
    %113 = arith.addf %104, %112 : vector<16x8xf32>
    %114 = vector.extract_strided_slice %54 {offsets = [0, 7], sizes = [16, 1], strides = [1, 1]} : vector<16x16xf32> to vector<16x1xf32>
    %115 = vector.extract_strided_slice %29 {offsets = [48, 0], sizes = [16, 4], strides = [1, 1]} : vector<64x4xf32> to vector<16x4xf32>
    %116 = vector.broadcast %114 : vector<16x1xf32> to vector<16x4xf32>
    %117 = arith.mulf %116, %115 : vector<16x4xf32>
    %118 = arith.addf %109, %117 : vector<16x4xf32>
    %119 = vector.extract_strided_slice %11 {offsets = [48, 0], sizes = [16, 8], strides = [1, 1]} : vector<64x8xf32> to vector<16x8xf32>
    %120 = vector.broadcast %114 : vector<16x1xf32> to vector<16x8xf32>
    %121 = arith.mulf %120, %119 : vector<16x8xf32>
    %122 = arith.addf %113, %121 : vector<16x8xf32>
    %123 = vector.extract_strided_slice %54 {offsets = [0, 8], sizes = [16, 1], strides = [1, 1]} : vector<16x16xf32> to vector<16x1xf32>
    %124 = vector.extract_strided_slice %29 {offsets = [0, 0], sizes = [16, 4], strides = [1, 1]} : vector<64x4xf32> to vector<16x4xf32>
    %125 = vector.broadcast %123 : vector<16x1xf32> to vector<16x4xf32>
    %126 = arith.mulf %125, %124 : vector<16x4xf32>
    %127 = vector.extract_strided_slice %11 {offsets = [0, 0], sizes = [16, 8], strides = [1, 1]} : vector<64x8xf32> to vector<16x8xf32>
    %128 = vector.broadcast %123 : vector<16x1xf32> to vector<16x8xf32>
    %129 = arith.mulf %128, %127 : vector<16x8xf32>
    %130 = vector.extract_strided_slice %54 {offsets = [0, 9], sizes = [16, 1], strides = [1, 1]} : vector<16x16xf32> to vector<16x1xf32>
    %131 = vector.extract_strided_slice %29 {offsets = [16, 0], sizes = [16, 4], strides = [1, 1]} : vector<64x4xf32> to vector<16x4xf32>
    %132 = vector.broadcast %130 : vector<16x1xf32> to vector<16x4xf32>
    %133 = arith.mulf %132, %131 : vector<16x4xf32>
    %134 = arith.addf %126, %133 : vector<16x4xf32>
    %135 = vector.extract_strided_slice %11 {offsets = [16, 0], sizes = [16, 8], strides = [1, 1]} : vector<64x8xf32> to vector<16x8xf32>
    %136 = vector.broadcast %130 : vector<16x1xf32> to vector<16x8xf32>
    %137 = arith.mulf %136, %135 : vector<16x8xf32>
    %138 = arith.addf %129, %137 : vector<16x8xf32>
    %139 = vector.extract_strided_slice %54 {offsets = [0, 10], sizes = [16, 1], strides = [1, 1]} : vector<16x16xf32> to vector<16x1xf32>
    %140 = vector.extract_strided_slice %29 {offsets = [32, 0], sizes = [16, 4], strides = [1, 1]} : vector<64x4xf32> to vector<16x4xf32>
    %141 = vector.broadcast %139 : vector<16x1xf32> to vector<16x4xf32>
    %142 = arith.mulf %141, %140 : vector<16x4xf32>
    %143 = arith.addf %134, %142 : vector<16x4xf32>
    %144 = vector.extract_strided_slice %11 {offsets = [32, 0], sizes = [16, 8], strides = [1, 1]} : vector<64x8xf32> to vector<16x8xf32>
    %145 = vector.broadcast %139 : vector<16x1xf32> to vector<16x8xf32>
    %146 = arith.mulf %145, %144 : vector<16x8xf32>
    %147 = arith.addf %138, %146 : vector<16x8xf32>
    %148 = vector.extract_strided_slice %54 {offsets = [0, 11], sizes = [16, 1], strides = [1, 1]} : vector<16x16xf32> to vector<16x1xf32>
    %149 = vector.extract_strided_slice %29 {offsets = [48, 0], sizes = [16, 4], strides = [1, 1]} : vector<64x4xf32> to vector<16x4xf32>
    %150 = vector.broadcast %148 : vector<16x1xf32> to vector<16x4xf32>
    %151 = arith.mulf %150, %149 : vector<16x4xf32>
    %152 = arith.addf %143, %151 : vector<16x4xf32>
    %153 = vector.extract_strided_slice %11 {offsets = [48, 0], sizes = [16, 8], strides = [1, 1]} : vector<64x8xf32> to vector<16x8xf32>
    %154 = vector.broadcast %148 : vector<16x1xf32> to vector<16x8xf32>
    %155 = arith.mulf %154, %153 : vector<16x8xf32>
    %156 = arith.addf %147, %155 : vector<16x8xf32>
    %157 = vector.extract_strided_slice %54 {offsets = [0, 12], sizes = [16, 1], strides = [1, 1]} : vector<16x16xf32> to vector<16x1xf32>
    %158 = vector.extract_strided_slice %29 {offsets = [0, 0], sizes = [16, 4], strides = [1, 1]} : vector<64x4xf32> to vector<16x4xf32>
    %159 = vector.broadcast %157 : vector<16x1xf32> to vector<16x4xf32>
    %160 = arith.mulf %159, %158 : vector<16x4xf32>
    %161 = vector.extract_strided_slice %11 {offsets = [0, 0], sizes = [16, 8], strides = [1, 1]} : vector<64x8xf32> to vector<16x8xf32>
    %162 = vector.broadcast %157 : vector<16x1xf32> to vector<16x8xf32>
    %163 = arith.mulf %162, %161 : vector<16x8xf32>
    %164 = vector.extract_strided_slice %54 {offsets = [0, 13], sizes = [16, 1], strides = [1, 1]} : vector<16x16xf32> to vector<16x1xf32>
    %165 = vector.extract_strided_slice %29 {offsets = [16, 0], sizes = [16, 4], strides = [1, 1]} : vector<64x4xf32> to vector<16x4xf32>
    %166 = vector.broadcast %164 : vector<16x1xf32> to vector<16x4xf32>
    %167 = arith.mulf %166, %165 : vector<16x4xf32>
    %168 = arith.addf %160, %167 : vector<16x4xf32>
    %169 = vector.extract_strided_slice %11 {offsets = [16, 0], sizes = [16, 8], strides = [1, 1]} : vector<64x8xf32> to vector<16x8xf32>
    %170 = vector.broadcast %164 : vector<16x1xf32> to vector<16x8xf32>
    %171 = arith.mulf %170, %169 : vector<16x8xf32>
    %172 = arith.addf %163, %171 : vector<16x8xf32>
    %173 = vector.extract_strided_slice %54 {offsets = [0, 14], sizes = [16, 1], strides = [1, 1]} : vector<16x16xf32> to vector<16x1xf32>
    %174 = vector.extract_strided_slice %29 {offsets = [32, 0], sizes = [16, 4], strides = [1, 1]} : vector<64x4xf32> to vector<16x4xf32>
    %175 = vector.broadcast %173 : vector<16x1xf32> to vector<16x4xf32>
    %176 = arith.mulf %175, %174 : vector<16x4xf32>
    %177 = arith.addf %168, %176 : vector<16x4xf32>
    %178 = vector.extract_strided_slice %11 {offsets = [32, 0], sizes = [16, 8], strides = [1, 1]} : vector<64x8xf32> to vector<16x8xf32>
    %179 = vector.broadcast %173 : vector<16x1xf32> to vector<16x8xf32>
    %180 = arith.mulf %179, %178 : vector<16x8xf32>
    %181 = arith.addf %172, %180 : vector<16x8xf32>
    %182 = vector.extract_strided_slice %54 {offsets = [0, 15], sizes = [16, 1], strides = [1, 1]} : vector<16x16xf32> to vector<16x1xf32>
    %183 = vector.extract_strided_slice %29 {offsets = [48, 0], sizes = [16, 4], strides = [1, 1]} : vector<64x4xf32> to vector<16x4xf32>
    %184 = vector.broadcast %182 : vector<16x1xf32> to vector<16x4xf32>
    %185 = arith.mulf %184, %183 : vector<16x4xf32>
    %186 = arith.addf %177, %185 : vector<16x4xf32>
    %187 = vector.extract_strided_slice %11 {offsets = [48, 0], sizes = [16, 8], strides = [1, 1]} : vector<64x8xf32> to vector<16x8xf32>
    %188 = vector.broadcast %182 : vector<16x1xf32> to vector<16x8xf32>
    %189 = arith.mulf %188, %187 : vector<16x8xf32>
    %190 = arith.addf %181, %189 : vector<16x8xf32>
    %c120 = arith.constant 120 : index
    %c0_28 = arith.constant 0 : index
    %191 = vector.load %arg4[%c120, %c0_28] : memref<184x128xf32, #tpu.memory_space<vmem>>, vector<8x4xf32>
    %c128 = arith.constant 128 : index
    %c0_29 = arith.constant 0 : index
    %192 = vector.load %arg4[%c128, %c0_29] : memref<184x128xf32, #tpu.memory_space<vmem>>, vector<8x8xf32>
    %c136 = arith.constant 136 : index
    %c0_30 = arith.constant 0 : index
    %193 = vector.load %arg4[%c136, %c0_30] : memref<184x128xf32, #tpu.memory_space<vmem>>, vector<2x4xf32>
    %c144 = arith.constant 144 : index
    %c0_31 = arith.constant 0 : index
    %194 = vector.load %arg4[%c144, %c0_31] : memref<184x128xf32, #tpu.memory_space<vmem>>, vector<2x8xf32>
    %195 = vector.extract_strided_slice %193 {offsets = [0, 0], sizes = [1, 4], strides = [1, 1]} : vector<2x4xf32> to vector<1x4xf32>
    %196 = vector.extract_strided_slice %194 {offsets = [0, 0], sizes = [1, 8], strides = [1, 1]} : vector<2x8xf32> to vector<1x8xf32>
    %197 = vector.extract_strided_slice %191 {offsets = [0, 0], sizes = [1, 4], strides = [1, 1]} : vector<8x4xf32> to vector<1x4xf32>
    %198 = vector.broadcast %197 : vector<1x4xf32> to vector<16x4xf32>
    %199 = arith.mulf %198, %84 : vector<16x4xf32>
    %200 = vector.broadcast %195 : vector<1x4xf32> to vector<16x4xf32>
    %201 = arith.addf %200, %199 : vector<16x4xf32>
    %202 = vector.extract_strided_slice %192 {offsets = [0, 0], sizes = [1, 8], strides = [1, 1]} : vector<8x8xf32> to vector<1x8xf32>
    %203 = vector.broadcast %202 : vector<1x8xf32> to vector<16x8xf32>
    %204 = arith.mulf %203, %88 : vector<16x8xf32>
    %205 = vector.broadcast %196 : vector<1x8xf32> to vector<16x8xf32>
    %206 = arith.addf %205, %204 : vector<16x8xf32>
    %207 = vector.extract_strided_slice %191 {offsets = [1, 0], sizes = [1, 4], strides = [1, 1]} : vector<8x4xf32> to vector<1x4xf32>
    %208 = vector.broadcast %207 : vector<1x4xf32> to vector<16x4xf32>
    %209 = arith.mulf %208, %118 : vector<16x4xf32>
    %210 = arith.addf %201, %209 : vector<16x4xf32>
    %211 = vector.extract_strided_slice %192 {offsets = [1, 0], sizes = [1, 8], strides = [1, 1]} : vector<8x8xf32> to vector<1x8xf32>
    %212 = vector.broadcast %211 : vector<1x8xf32> to vector<16x8xf32>
    %213 = arith.mulf %212, %122 : vector<16x8xf32>
    %214 = arith.addf %206, %213 : vector<16x8xf32>
    %215 = vector.extract_strided_slice %191 {offsets = [2, 0], sizes = [1, 4], strides = [1, 1]} : vector<8x4xf32> to vector<1x4xf32>
    %216 = vector.broadcast %215 : vector<1x4xf32> to vector<16x4xf32>
    %217 = arith.mulf %216, %152 : vector<16x4xf32>
    %218 = arith.addf %210, %217 : vector<16x4xf32>
    %219 = vector.extract_strided_slice %192 {offsets = [2, 0], sizes = [1, 8], strides = [1, 1]} : vector<8x8xf32> to vector<1x8xf32>
    %220 = vector.broadcast %219 : vector<1x8xf32> to vector<16x8xf32>
    %221 = arith.mulf %220, %156 : vector<16x8xf32>
    %222 = arith.addf %214, %221 : vector<16x8xf32>
    %223 = vector.extract_strided_slice %191 {offsets = [3, 0], sizes = [1, 4], strides = [1, 1]} : vector<8x4xf32> to vector<1x4xf32>
    %224 = vector.broadcast %223 : vector<1x4xf32> to vector<16x4xf32>
    %225 = arith.mulf %224, %186 : vector<16x4xf32>
    %226 = arith.addf %218, %225 : vector<16x4xf32>
    %227 = vector.extract_strided_slice %192 {offsets = [3, 0], sizes = [1, 8], strides = [1, 1]} : vector<8x8xf32> to vector<1x8xf32>
    %228 = vector.broadcast %227 : vector<1x8xf32> to vector<16x8xf32>
    %229 = arith.mulf %228, %190 : vector<16x8xf32>
    %230 = arith.addf %222, %229 : vector<16x8xf32>
    %c152 = arith.constant 152 : index
    %c0_32 = arith.constant 0 : index
    %231 = vector.load %arg4[%c152, %c0_32] : memref<184x128xf32, #tpu.memory_space<vmem>>, vector<4x128xf32>
    %232 = arith.truncf %226 : vector<16x4xf32> to vector<16x4xbf16>
    %233 = arith.truncf %231 : vector<4x128xf32> to vector<4x128xbf16>
    %cst_33 = arith.constant dense<0.000000e+00> : vector<16x128xf32>
    %234 = tpu.matmul %232, %233, %cst_33 {dimension_numbers = #tpu.dot_dimension_numbers<[1], [0], [0], [1], [0, 0, 1, 1], [], []>} : vector<16x4xbf16>, vector<4x128xbf16>, vector<16x128xf32> -> vector<16x128xf32>
    %c160 = arith.constant 160 : index
    %c0_34 = arith.constant 0 : index
    %235 = vector.load %arg4[%c160, %c0_34] : memref<184x128xf32, #tpu.memory_space<vmem>>, vector<8x128xf32>
    %236 = arith.truncf %230 : vector<16x8xf32> to vector<16x8xbf16>
    %237 = arith.truncf %235 : vector<8x128xf32> to vector<8x128xbf16>
    %cst_35 = arith.constant dense<0.000000e+00> : vector<16x128xf32>
    %238 = tpu.matmul %236, %237, %cst_35 {dimension_numbers = #tpu.dot_dimension_numbers<[1], [0], [0], [1], [0, 0, 1, 1], [], []>} : vector<16x8xbf16>, vector<8x128xbf16>, vector<16x128xf32> -> vector<16x128xf32>
    %239 = vector.extract_strided_slice %193 {offsets = [1, 0], sizes = [1, 4], strides = [1, 1]} : vector<2x4xf32> to vector<1x4xf32>
    %240 = vector.extract_strided_slice %194 {offsets = [1, 0], sizes = [1, 8], strides = [1, 1]} : vector<2x8xf32> to vector<1x8xf32>
    %241 = vector.extract_strided_slice %191 {offsets = [4, 0], sizes = [1, 4], strides = [1, 1]} : vector<8x4xf32> to vector<1x4xf32>
    %242 = vector.broadcast %241 : vector<1x4xf32> to vector<16x4xf32>
    %243 = arith.mulf %242, %84 : vector<16x4xf32>
    %244 = vector.broadcast %239 : vector<1x4xf32> to vector<16x4xf32>
    %245 = arith.addf %244, %243 : vector<16x4xf32>
    %246 = vector.extract_strided_slice %192 {offsets = [4, 0], sizes = [1, 8], strides = [1, 1]} : vector<8x8xf32> to vector<1x8xf32>
    %247 = vector.broadcast %246 : vector<1x8xf32> to vector<16x8xf32>
    %248 = arith.mulf %247, %88 : vector<16x8xf32>
    %249 = vector.broadcast %240 : vector<1x8xf32> to vector<16x8xf32>
    %250 = arith.addf %249, %248 : vector<16x8xf32>
    %251 = vector.extract_strided_slice %191 {offsets = [5, 0], sizes = [1, 4], strides = [1, 1]} : vector<8x4xf32> to vector<1x4xf32>
    %252 = vector.broadcast %251 : vector<1x4xf32> to vector<16x4xf32>
    %253 = arith.mulf %252, %118 : vector<16x4xf32>
    %254 = arith.addf %245, %253 : vector<16x4xf32>
    %255 = vector.extract_strided_slice %192 {offsets = [5, 0], sizes = [1, 8], strides = [1, 1]} : vector<8x8xf32> to vector<1x8xf32>
    %256 = vector.broadcast %255 : vector<1x8xf32> to vector<16x8xf32>
    %257 = arith.mulf %256, %122 : vector<16x8xf32>
    %258 = arith.addf %250, %257 : vector<16x8xf32>
    %259 = vector.extract_strided_slice %191 {offsets = [6, 0], sizes = [1, 4], strides = [1, 1]} : vector<8x4xf32> to vector<1x4xf32>
    %260 = vector.broadcast %259 : vector<1x4xf32> to vector<16x4xf32>
    %261 = arith.mulf %260, %152 : vector<16x4xf32>
    %262 = arith.addf %254, %261 : vector<16x4xf32>
    %263 = vector.extract_strided_slice %192 {offsets = [6, 0], sizes = [1, 8], strides = [1, 1]} : vector<8x8xf32> to vector<1x8xf32>
    %264 = vector.broadcast %263 : vector<1x8xf32> to vector<16x8xf32>
    %265 = arith.mulf %264, %156 : vector<16x8xf32>
    %266 = arith.addf %258, %265 : vector<16x8xf32>
    %267 = vector.extract_strided_slice %191 {offsets = [7, 0], sizes = [1, 4], strides = [1, 1]} : vector<8x4xf32> to vector<1x4xf32>
    %268 = vector.broadcast %267 : vector<1x4xf32> to vector<16x4xf32>
    %269 = arith.mulf %268, %186 : vector<16x4xf32>
    %270 = arith.addf %262, %269 : vector<16x4xf32>
    %271 = vector.extract_strided_slice %192 {offsets = [7, 0], sizes = [1, 8], strides = [1, 1]} : vector<8x8xf32> to vector<1x8xf32>
    %272 = vector.broadcast %271 : vector<1x8xf32> to vector<16x8xf32>
    %273 = arith.mulf %272, %190 : vector<16x8xf32>
    %274 = arith.addf %266, %273 : vector<16x8xf32>
    %c168 = arith.constant 168 : index
    %c0_36 = arith.constant 0 : index
    %275 = vector.load %arg4[%c168, %c0_36] : memref<184x128xf32, #tpu.memory_space<vmem>>, vector<4x128xf32>
    %276 = arith.truncf %270 : vector<16x4xf32> to vector<16x4xbf16>
    %277 = arith.truncf %275 : vector<4x128xf32> to vector<4x128xbf16>
    %cst_37 = arith.constant dense<0.000000e+00> : vector<16x128xf32>
    %278 = tpu.matmul %276, %277, %cst_37 {dimension_numbers = #tpu.dot_dimension_numbers<[1], [0], [0], [1], [0, 0, 1, 1], [], []>} : vector<16x4xbf16>, vector<4x128xbf16>, vector<16x128xf32> -> vector<16x128xf32>
    %c176 = arith.constant 176 : index
    %c0_38 = arith.constant 0 : index
    %279 = vector.load %arg4[%c176, %c0_38] : memref<184x128xf32, #tpu.memory_space<vmem>>, vector<8x128xf32>
    %280 = arith.truncf %274 : vector<16x8xf32> to vector<16x8xbf16>
    %281 = arith.truncf %279 : vector<8x128xf32> to vector<8x128xbf16>
    %cst_39 = arith.constant dense<0.000000e+00> : vector<16x128xf32>
    %282 = tpu.matmul %280, %281, %cst_39 {dimension_numbers = #tpu.dot_dimension_numbers<[1], [0], [0], [1], [0, 0, 1, 1], [], []>} : vector<16x8xbf16>, vector<8x128xbf16>, vector<16x128xf32> -> vector<16x128xf32>
    %283 = arith.addf %234, %238 : vector<16x128xf32>
    %284 = arith.addf %283, %278 : vector<16x128xf32>
    %285 = arith.addf %284, %282 : vector<16x128xf32>
    %cst_40 = arith.constant 0.000000e+00 : f32
    %286 = vector.broadcast %cst_40 : f32 to vector<16x128xf32>
    %287 = arith.maximumf %285, %286 : vector<16x128xf32>
    %c0_41 = arith.constant 0 : index
    %c0_42 = arith.constant 0 : index
    %288 = vector.load %arg5[%c0_41, %c0_42] : memref<16x128xf32, #tpu.memory_space<vmem>>, vector<16x128xf32>
    tpu.vector_store %arg5[%c0_41, %c0_42], %287 {strides = array<i32>} : memref<16x128xf32, #tpu.memory_space<vmem>>, vector<16x128xf32>,
    return
  }
  func.func @transform_0(%arg0: i32) -> (i32, i32) {
    %c0_i32 = arith.constant 0 : i32
    %c0_i32_0 = arith.constant 0 : i32
    %c0_i32_1 = arith.constant 0 : i32
    return %c0_i32, %c0_i32_0 : i32, i32
  }
  func.func @transform_1(%arg0: i32) -> (i32, i32) {
    %c0_i32 = arith.constant 0 : i32
    %c0_i32_0 = arith.constant 0 : i32
    %c0_i32_1 = arith.constant 0 : i32
    return %c0_i32, %c0_i32_0 : i32, i32
  }
  func.func @transform_2(%arg0: i32) -> (i32, i32) {
    %c0_i32 = arith.constant 0 : i32
    %c0_i32_0 = arith.constant 0 : i32
    %c0_i32_1 = arith.constant 0 : i32
    return %c0_i32, %c0_i32_0 : i32, i32
  }
  func.func @transform_3(%arg0: i32) -> (i32, i32) {
    %c0_i32 = arith.constant 0 : i32
    %c0_i32_0 = arith.constant 0 : i32
    %c0_i32_1 = arith.constant 0 : i32
    return %c0_i32, %c0_i32_0 : i32, i32
  }
  func.func @transform_4(%arg0: i32) -> (i32, i32) {
    %c0_i32 = arith.constant 0 : i32
    %c0_i32_0 = arith.constant 0 : i32
    %c0_i32_1 = arith.constant 0 : i32
    return %c0_i32, %c0_i32_0 : i32, i32
  }
}

</mosaic_0001>

<llo_original>
// kernel: pointcnn_forward.1
$region0: #{pointcnn_forward.1}
  #allocation0 [shape = 'u32[]', space=smem, size = 0x4, offset = 0x4, fixed_abs, tag = 'smem constant byte address 0x4 - core index']
  #allocation1 [shape = 'u32[144,128]{1,0:T(1,128)}', space=vmem, size = 0x12000, scoped, tag = 'internal scratch']
  %s0 = inlined_call_operand.vmem [shape: f32[64,3], index: 0, kind: input, shape index: {}]
  %s1 = inlined_call_operand.vmem [shape: f32[16,12], index: 1, kind: input, shape index: {}]
  %s2 = inlined_call_operand.vmem [shape: f32[64,8], index: 2, kind: input, shape index: {}]
  %s3 = inlined_call_operand.vmem [shape: f32[184,128], index: 3, kind: input, shape index: {}]
  %s4 = inlined_call_operand.vmem [shape: f32[16,128], index: 4, kind: output, shape index: {}]
  %s5 = sld [smem:[#allocation0]]
  $region26: #{pointcnn_forward.1} parent=0
    _
  %s7 = ssub.s32 1, %s5
  %s8 = scalar_select 0, %s7, %s5
  // Predicated region
  $region2: #{pointcnn_forward.1} parent=0 // pred_check
    _
  $region3: #{pointcnn_forward.1} parent=0 // pred_check_branch
    %10 = sbr.rel (0) target = $region5
  $region4: #{pointcnn_forward.1} parent=0 // pred_region
    _
  $region5: #{pointcnn_forward.1} parent=0 // pred_fallthru
    _
  // Predicated region
  $region6: #{pointcnn_forward.1} parent=0 // pred_check
    _
  $region7: #{pointcnn_forward.1} parent=0 // pred_check_branch
    %12 = sbr.rel (0) target = $region9
  $region8: #{pointcnn_forward.1} parent=0 // pred_region
    _
  $region9: #{pointcnn_forward.1} parent=0 // pred_fallthru
    _
  // Predicated region
  $region10: #{pointcnn_forward.1} parent=0 // pred_check
    _
  $region11: #{pointcnn_forward.1} parent=0 // pred_check_branch
    %14 = sbr.rel (0) target = $region13
  $region12: #{pointcnn_forward.1} parent=0 // pred_region
    _
  $region13: #{pointcnn_forward.1} parent=0 // pred_fallthru
    _
  // Predicated region
  $region14: #{pointcnn_forward.1} parent=0 // pred_check
    _
  $region15: #{pointcnn_forward.1} parent=0 // pred_check_branch
    %16 = sbr.rel (0) target = $region17
  $region16: #{pointcnn_forward.1} parent=0 // pred_region
    _
  $region17: #{pointcnn_forward.1} parent=0 // pred_fallthru
    _
  %v18 = vld [vmem:[%s0] sm:$0xff]
  %v19 = vld [vmem:[%s0 + $0x8] sm:$0xff]
  %v20 = vld [vmem:[%s0 + $0x10] sm:$0xff]
  %v21 = vld [vmem:[%s0 + $0x18] sm:$0xff]
  %v22 = vld [vmem:[%s0 + $0x20] sm:$0xff]
  %v23 = vld [vmem:[%s0 + $0x28] sm:$0xff]
  %v24 = vld [vmem:[%s0 + $0x30] sm:$0xff]
  %v25 = vld [vmem:[%s0 + $0x38] sm:$0xff]
  %v26 = vld [vmem:[%s1] sm:$0xff]
  %v27 = vld [vmem:[%s1 + $0x8] sm:$0xff]
  %v28 = vld [vmem:[%s2] sm:$0xff]
  %v29 = vld [vmem:[%s2 + $0x8] sm:$0xff]
  %v30 = vld [vmem:[%s2 + $0x10] sm:$0xff]
  %v31 = vld [vmem:[%s2 + $0x18] sm:$0xff]
  %v32 = vld [vmem:[%s2 + $0x20] sm:$0xff]
  %v33 = vld [vmem:[%s2 + $0x28] sm:$0xff]
  %v34 = vld [vmem:[%s2 + $0x30] sm:$0xff]
  %v35 = vld [vmem:[%s2 + $0x38] sm:$0xff]
  %v36 = vld [vmem:[%s3] sm:$0xff]
  %v37 = vpack.c.bf16 %v29, %v28
  %v38 = vpack.c.bf16 %v31, %v30
  %v39 = vpack.c.bf16 %v33, %v32
  %v40 = vpack.c.bf16 %v35, %v34
  %v41 = vpack.c.bf16 %v36, %v36
  %v42 = vld [vmem:[%s3 + $0x8] sm:$0x1]
  %v43 = vlaneseq
  %v44 = vshrl.u32 %v43, 7
  %v45 = vsub.s32 0, %v44
  %v46 = vrot.slane %v42, %v45
  %vm47 = vcmask 64512
  %v49 = vsel %vm47, %v37, 0
  %v52 = vsel %vm47, %v38, 0
  %v55 = vsel %vm47, %v39, 0
  %v58 = vsel %vm47, %v40, 0
  %vm60 = vcmask 1043456
  %v62 = vsel %vm60, %v41, 0
  %64 = vmatprep.subr.bf16.mxu0 0
  %65 = vmatpush1.bf16.msra.mxu0 %v62
  %66 = vmatprep.subr.bf16.mxu0 0
  %67 = vmatpush1.bf16.msra.mxu0 0
  %68 = vmatprep.subr.bf16.mxu0 0
  %69 = vmatpush1.bf16.msra.mxu0 0
  %70 = vmatprep.subr.bf16.mxu0 0
  %71 = vmatpush1.bf16.msra.mxu0 0
  %72 = vmatprep.subr.bf16.mxu0 0
  %73 = vmatpush1.bf16.msra.mxu0 0
  %74 = vmatprep.subr.bf16.mxu0 0
  %75 = vmatpush1.bf16.msra.mxu0 0
  %76 = vmatprep.subr.bf16.mxu0 0
  %77 = vmatpush1.bf16.msra.mxu0 0
  %78 = vmatprep.subr.bf16.mxu0 0
  %79 = vmatpush1.bf16.msra.mxu0 0
  %80 = vmatprep.subr.bf16.mxu0 0
  %81 = vmatpush1.bf16.msra.mxu0 0
  %82 = vmatprep.subr.bf16.mxu0 0
  %83 = vmatpush1.bf16.msra.mxu0 0
  %84 = vmatprep.subr.bf16.mxu0 0
  %85 = vmatpush1.bf16.msra.mxu0 0
  %86 = vmatprep.subr.bf16.mxu0 0
  %87 = vmatpush1.bf16.msra.mxu0 0
  %88 = vmatprep.subr.bf16.mxu0 0
  %89 = vmatpush1.bf16.msra.mxu0 0
  %90 = vmatprep.subr.bf16.mxu0 0
  %91 = vmatpush1.bf16.msra.mxu0 0
  %92 = vmatprep.subr.bf16.mxu0 0
  %93 = vmatpush1.bf16.msra.mxu0 0
  %94 = vmatprep.subr.bf16.mxu0 0
  %95 = vmatpush1.bf16.msra.mxu0 0
  %96 = vmatprep.mubr.bf16.mxu0 0
  %97 = vmatmul.mubr.bf16.gmra.mrb[0].mxu0 %v49
  %v98 = vpop.f32.mrb[0].mxu0
  %v99 = vadd.f32 %v46, %v98
  %v100 = vpop.f32.mrb[0].mxu0
  %v101 = vpop.f32.mrb[0].mxu0
  %v102 = vadd.f32 %v46, %v101
  %v103 = vpop.f32.mrb[0].mxu0
  %104 = vmatprep.mubr.bf16.mxu0 0
  %105 = vmatmul.mubr.bf16.gmra.mrb[0].mxu0 %v52
  %v106 = vpop.f32.mrb[0].mxu0
  %v107 = vadd.f32 %v46, %v106
  %v108 = vpop.f32.mrb[0].mxu0
  %v109 = vpop.f32.mrb[0].mxu0
  %v110 = vadd.f32 %v46, %v109
  %v111 = vpop.f32.mrb[0].mxu0
  %112 = vmatprep.mubr.bf16.mxu0 0
  %113 = vmatmul.mubr.bf16.gmra.mrb[0].mxu0 %v55
  %v114 = vpop.f32.mrb[0].mxu0
  %v115 = vadd.f32 %v46, %v114
  %v116 = vpop.f32.mrb[0].mxu0
  %v117 = vpop.f32.mrb[0].mxu0
  %v118 = vadd.f32 %v46, %v117
  %v119 = vpop.f32.mrb[0].mxu0
  %120 = vmatprep.mubr.bf16.mxu0 0
  %121 = vmatmul.mubr.bf16.gmra.mrb[0].mxu0 %v58
  %v122 = vpop.f32.mrb[0].mxu0
  %v123 = vadd.f32 %v46, %v122
  %v124 = vpop.f32.mrb[0].mxu0
  %v125 = vpop.f32.mrb[0].mxu0
  %v126 = vadd.f32 %v46, %v125
  %v127 = vpop.f32.mrb[0].mxu0
  %128 = vdwg.mxu0
  %v129 = vmax.f32 %v99, 0.0
  %v130 = vmax.f32 %v102, 0.0
  %v131 = vmax.f32 %v107, 0.0
  %v132 = vmax.f32 %v110, 0.0
  %v133 = vmax.f32 %v115, 0.0
  %v134 = vmax.f32 %v118, 0.0
  %v135 = vmax.f32 %v123, 0.0
  %v136 = vmax.f32 %v126, 0.0
  %v137 = vld [vmem:[%s3 + $0x10] sm:$0x7]
  %v138 = vpack.c.bf16 %v19, %v18
  %v139 = vpack.c.bf16 %v21, %v20
  %v140 = vpack.c.bf16 %v23, %v22
  %v141 = vpack.c.bf16 %v25, %v24
  %v142 = vpack.c.bf16 %v137, %v137
  %v143 = vld [vmem:[%s3 + $0x18] sm:$0x1]
  %v144 = vlaneseq
  %v145 = vshrl.u32 %v144, 7
  %v146 = vsub.s32 0, %v145
  %v147 = vrot.slane %v143, %v146
  %vm148 = vcmask 23552
  %v150 = vsel %vm148, %v138, 0
  %v153 = vsel %vm148, %v139, 0
  %v156 = vsel %vm148, %v140, 0
  %v159 = vsel %vm148, %v141, 0
  %vm161 = vcmask 1040384
  %vm162 = vcmask 1041408
  %v163 = vsel %vm161, 4294967295, 65535
  %v164 = vsel %vm162, %v163, 0
  %v166 = vand.u32 %v142, %v164
  %168 = vmatprep.subr.bf16.mxu0 0
  %169 = vmatpush1.bf16.msra.mxu0 %v166
  %170 = vmatprep.subr.bf16.mxu0 0
  %171 = vmatpush1.bf16.msra.mxu0 0
  %172 = vmatprep.subr.bf16.mxu0 0
  %173 = vmatpush1.bf16.msra.mxu0 0
  %174 = vmatprep.subr.bf16.mxu0 0
  %175 = vmatpush1.bf16.msra.mxu0 0
  %176 = vmatprep.subr.bf16.mxu0 0
  %177 = vmatpush1.bf16.msra.mxu0 0
  %178 = vmatprep.subr.bf16.mxu0 0
  %179 = vmatpush1.bf16.msra.mxu0 0
  %180 = vmatprep.subr.bf16.mxu0 0
  %181 = vmatpush1.bf16.msra.mxu0 0
  %182 = vmatprep.subr.bf16.mxu0 0
  %183 = vmatpush1.bf16.msra.mxu0 0
  %184 = vmatprep.subr.bf16.mxu0 0
  %185 = vmatpush1.bf16.msra.mxu0 0
  %186 = vmatprep.subr.bf16.mxu0 0
  %187 = vmatpush1.bf16.msra.mxu0 0
  %188 = vmatprep.subr.bf16.mxu0 0
  %189 = vmatpush1.bf16.msra.mxu0 0
  %190 = vmatprep.subr.bf16.mxu0 0
  %191 = vmatpush1.bf16.msra.mxu0 0
  %192 = vmatprep.subr.bf16.mxu0 0
  %193 = vmatpush1.bf16.msra.mxu0 0
  %194 = vmatprep.subr.bf16.mxu0 0
  %195 = vmatpush1.bf16.msra.mxu0 0
  %196 = vmatprep.subr.bf16.mxu0 0
  %197 = vmatpush1.bf16.msra.mxu0 0
  %198 = vmatprep.subr.bf16.mxu0 0
  %199 = vmatpush1.bf16.msra.mxu0 0
  %200 = vmatprep.mubr.bf16.mxu0 0
  %201 = vmatmul.mubr.bf16.gmra.mrb[0].mxu0 %v150
  %v202 = vpop.f32.mrb[0].mxu0
  %v203 = vadd.f32 %v147, %v202
  %v204 = vpop.f32.mrb[0].mxu0
  %v205 = vpop.f32.mrb[0].mxu0
  %v206 = vadd.f32 %v147, %v205
  %v207 = vpop.f32.mrb[0].mxu0
  %208 = vmatprep.mubr.bf16.mxu0 0
  %209 = vmatmul.mubr.bf16.gmra.mrb[0].mxu0 %v153
  %v210 = vpop.f32.mrb[0].mxu0
  %v211 = vadd.f32 %v147, %v210
  %v212 = vpop.f32.mrb[0].mxu0
  %v213 = vpop.f32.mrb[0].mxu0
  %v214 = vadd.f32 %v147, %v213
  %v215 = vpop.f32.mrb[0].mxu0
  %216 = vmatprep.mubr.bf16.mxu0 0
  %217 = vmatmul.mubr.bf16.gmra.mrb[0].mxu0 %v156
  %v218 = vpop.f32.mrb[0].mxu0
  %v219 = vadd.f32 %v147, %v218
  %v220 = vpop.f32.mrb[0].mxu0
  %v221 = vpop.f32.mrb[0].mxu0
  %v222 = vadd.f32 %v147, %v221
  %v223 = vpop.f32.mrb[0].mxu0
  %224 = vmatprep.mubr.bf16.mxu0 0
  %225 = vmatmul.mubr.bf16.gmra.mrb[0].mxu0 %v159
  %v226 = vpop.f32.mrb[0].mxu0
  %v227 = vadd.f32 %v147, %v226
  %v228 = vpop.f32.mrb[0].mxu0
  %v229 = vpop.f32.mrb[0].mxu0
  %v230 = vadd.f32 %v147, %v229
  %v231 = vpop.f32.mrb[0].mxu0
  %232 = vdwg.mxu0
  %v233 = vmax.f32 %v203, 0.0
  %v234 = vmax.f32 %v206, 0.0
  %v235 = vmax.f32 %v211, 0.0
  %v236 = vmax.f32 %v214, 0.0
  %v237 = vmax.f32 %v219, 0.0
  %v238 = vmax.f32 %v222, 0.0
  %v239 = vmax.f32 %v227, 0.0
  %v240 = vmax.f32 %v230, 0.0
  %v241 = vld [vmem:[%s3 + $0x20] sm:$0xf]
  %v242 = vpack.c.bf16 %v234, %v233
  %v243 = vpack.c.bf16 %v236, %v235
  %v244 = vpack.c.bf16 %v238, %v237
  %v245 = vpack.c.bf16 %v240, %v239
  %v246 = vpack.c.bf16 %v241, %v241
  %v247 = vld [vmem:[%s3 + $0x28] sm:$0x1]
  %v248 = vlaneseq
  %v249 = vshrl.u32 %v248, 7
  %v250 = vsub.s32 0, %v249
  %v251 = vrot.slane %v247, %v250
  %vm252 = vcmask 31744
  %v254 = vsel %vm252, %v242, 0
  %v257 = vsel %vm252, %v243, 0
  %v260 = vsel %vm252, %v244, 0
  %v263 = vsel %vm252, %v245, 0
  %v266 = vsel %vm162, %v246, 0
  %268 = vmatprep.subr.bf16.mxu0 0
  %269 = vmatpush1.bf16.msra.mxu0 %v266
  %270 = vmatprep.subr.bf16.mxu0 0
  %271 = vmatpush1.bf16.msra.mxu0 0
  %272 = vmatprep.subr.bf16.mxu0 0
  %273 = vmatpush1.bf16.msra.mxu0 0
  %274 = vmatprep.subr.bf16.mxu0 0
  %275 = vmatpush1.bf16.msra.mxu0 0
  %276 = vmatprep.subr.bf16.mxu0 0
  %277 = vmatpush1.bf16.msra.mxu0 0
  %278 = vmatprep.subr.bf16.mxu0 0
  %279 = vmatpush1.bf16.msra.mxu0 0
  %280 = vmatprep.subr.bf16.mxu0 0
  %281 = vmatpush1.bf16.msra.mxu0 0
  %282 = vmatprep.subr.bf16.mxu0 0
  %283 = vmatpush1.bf16.msra.mxu0 0
  %284 = vmatprep.subr.bf16.mxu0 0
  %285 = vmatpush1.bf16.msra.mxu0 0
  %286 = vmatprep.subr.bf16.mxu0 0
  %287 = vmatpush1.bf16.msra.mxu0 0
  %288 = vmatprep.subr.bf16.mxu0 0
  %289 = vmatpush1.bf16.msra.mxu0 0
  %290 = vmatprep.subr.bf16.mxu0 0
  %291 = vmatpush1.bf16.msra.mxu0 0
  %292 = vmatprep.subr.bf16.mxu0 0
  %293 = vmatpush1.bf16.msra.mxu0 0
  %294 = vmatprep.subr.bf16.mxu0 0
  %295 = vmatpush1.bf16.msra.mxu0 0
  %296 = vmatprep.subr.bf16.mxu0 0
  %297 = vmatpush1.bf16.msra.mxu0 0
  %298 = vmatprep.subr.bf16.mxu0 0
  %299 = vmatpush1.bf16.msra.mxu0 0
  %300 = vmatprep.mubr.bf16.mxu0 0
  %301 = vmatmul.mubr.bf16.gmra.mrb[0].mxu0 %v254
  %v302 = vpop.f32.mrb[0].mxu0
  %v303 = vadd.f32 %v251, %v302
  %v304 = vpop.f32.mrb[0].mxu0
  %v305 = vpop.f32.mrb[0].mxu0
  %v306 = vadd.f32 %v251, %v305
  %v307 = vpop.f32.mrb[0].mxu0
  %308 = vmatprep.mubr.bf16.mxu0 0
  %309 = vmatmul.mubr.bf16.gmra.mrb[0].mxu0 %v257
  %v310 = vpop.f32.mrb[0].mxu0
  %v311 = vadd.f32 %v251, %v310
  %v312 = vpop.f32.mrb[0].mxu0
  %v313 = vpop.f32.mrb[0].mxu0
  %v314 = vadd.f32 %v251, %v313
  %v315 = vpop.f32.mrb[0].mxu0
  %316 = vmatprep.mubr.bf16.mxu0 0
  %317 = vmatmul.mubr.bf16.gmra.mrb[0].mxu0 %v260
  %v318 = vpop.f32.mrb[0].mxu0
  %v319 = vadd.f32 %v251, %v318
  %v320 = vpop.f32.mrb[0].mxu0
  %v321 = vpop.f32.mrb[0].mxu0
  %v322 = vadd.f32 %v251, %v321
  %v323 = vpop.f32.mrb[0].mxu0
  %324 = vmatprep.mubr.bf16.mxu0 0
  %325 = vmatmul.mubr.bf16.gmra.mrb[0].mxu0 %v263
  %v326 = vpop.f32.mrb[0].mxu0
  %v327 = vadd.f32 %v251, %v326
  %v328 = vpop.f32.mrb[0].mxu0
  %v329 = vpop.f32.mrb[0].mxu0
  %v330 = vadd.f32 %v251, %v329
  %v331 = vpop.f32.mrb[0].mxu0
  %332 = vdwg.mxu0
  %v333 = vmax.f32 %v303, 0.0
  %v334 = vmax.f32 %v306, 0.0
  %v335 = vmax.f32 %v311, 0.0
  %v336 = vmax.f32 %v314, 0.0
  %v337 = vmax.f32 %v319, 0.0
  %v338 = vmax.f32 %v322, 0.0
  %v339 = vmax.f32 %v327, 0.0
  %v340 = vmax.f32 %v330, 0.0
  %v341 = vld [vmem:[%s3 + $0x30] sm:$0xff]
  %v342 = vld [vmem:[%s3 + $0x38] sm:$0xf]
  %v343 = vpack.c.bf16 %v27, %v26
  %v344 = vpack.c.bf16 %v342, %v341
  %v345 = vld [vmem:[%s3 + $0x40] sm:$0x1]
  %v346 = vlaneseq
  %v347 = vshrl.u32 %v346, 7
  %v348 = vsub.s32 0, %v347
  %v349 = vrot.slane %v345, %v348
  %vm350 = vcmask 97280
  %v352 = vsel %vm350, %v343, 0
  %vm354 = vcmask 1045504
  %v356 = vsel %vm354, %v344, 0
  %358 = vmatprep.subr.bf16.mxu0 0
  %359 = vmatpush1.bf16.msra.mxu0 %v356
  %360 = vmatprep.subr.bf16.mxu0 0
  %361 = vmatpush1.bf16.msra.mxu0 0
  %362 = vmatprep.subr.bf16.mxu0 0
  %363 = vmatpush1.bf16.msra.mxu0 0
  %364 = vmatprep.subr.bf16.mxu0 0
  %365 = vmatpush1.bf16.msra.mxu0 0
  %366 = vmatprep.subr.bf16.mxu0 0
  %367 = vmatpush1.bf16.msra.mxu0 0
  %368 = vmatprep.subr.bf16.mxu0 0
  %369 = vmatpush1.bf16.msra.mxu0 0
  %370 = vmatprep.subr.bf16.mxu0 0
  %371 = vmatpush1.bf16.msra.mxu0 0
  %372 = vmatprep.subr.bf16.mxu0 0
  %373 = vmatpush1.bf16.msra.mxu0 0
  %374 = vmatprep.subr.bf16.mxu0 0
  %375 = vmatpush1.bf16.msra.mxu0 0
  %376 = vmatprep.subr.bf16.mxu0 0
  %377 = vmatpush1.bf16.msra.mxu0 0
  %378 = vmatprep.subr.bf16.mxu0 0
  %379 = vmatpush1.bf16.msra.mxu0 0
  %380 = vmatprep.subr.bf16.mxu0 0
  %381 = vmatpush1.bf16.msra.mxu0 0
  %382 = vmatprep.subr.bf16.mxu0 0
  %383 = vmatpush1.bf16.msra.mxu0 0
  %384 = vmatprep.subr.bf16.mxu0 0
  %385 = vmatpush1.bf16.msra.mxu0 0
  %386 = vmatprep.subr.bf16.mxu0 0
  %387 = vmatpush1.bf16.msra.mxu0 0
  %388 = vmatprep.subr.bf16.mxu0 0
  %389 = vmatpush1.bf16.msra.mxu0 0
  %390 = vmatprep.mubr.bf16.mxu0 0
  %391 = vmatmul.mubr.bf16.gmra.mrb[0].mxu0 %v352
  %v392 = vpop.f32.mrb[0].mxu0
  %v393 = vadd.f32 %v349, %v392
  %v394 = vpop.f32.mrb[0].mxu0
  %v395 = vpop.f32.mrb[0].mxu0
  %v396 = vadd.f32 %v349, %v395
  %v397 = vpop.f32.mrb[0].mxu0
  %398 = vdwg.mxu0
  %v399 = vmax.f32 %v393, 0.0
  %v400 = vmax.f32 %v396, 0.0
  %v401 = vld [vmem:[%s3 + $0x48] sm:$0xff]
  %v402 = vld [vmem:[%s3 + $0x50] sm:$0xff]
  %v403 = vpack.c.bf16 %v400, %v399
  %v404 = vpack.c.bf16 %v402, %v401
  %v405 = vld [vmem:[%s3 + $0x58] sm:$0x1]
  %v406 = vlaneseq
  %v407 = vshrl.u32 %v406, 7
  %v408 = vsub.s32 0, %v407
  %v409 = vrot.slane %v405, %v408
  %vm410 = vcmask 130048
  %v412 = vsel %vm410, %v403, 0
  %414 = vmatprep.subr.bf16.mxu0 0
  %415 = vmatpush1.bf16.msra.mxu0 %v404
  %416 = vmatprep.subr.bf16.mxu0 0
  %417 = vmatpush1.bf16.msra.mxu0 0
  %418 = vmatprep.subr.bf16.mxu0 0
  %419 = vmatpush1.bf16.msra.mxu0 0
  %420 = vmatprep.subr.bf16.mxu0 0
  %421 = vmatpush1.bf16.msra.mxu0 0
  %422 = vmatprep.subr.bf16.mxu0 0
  %423 = vmatpush1.bf16.msra.mxu0 0
  %424 = vmatprep.subr.bf16.mxu0 0
  %425 = vmatpush1.bf16.msra.mxu0 0
  %426 = vmatprep.subr.bf16.mxu0 0
  %427 = vmatpush1.bf16.msra.mxu0 0
  %428 = vmatprep.subr.bf16.mxu0 0
  %429 = vmatpush1.bf16.msra.mxu0 0
  %430 = vmatprep.subr.bf16.mxu0 0
  %431 = vmatpush1.bf16.msra.mxu0 0
  %432 = vmatprep.subr.bf16.mxu0 0
  %433 = vmatpush1.bf16.msra.mxu0 0
  %434 = vmatprep.subr.bf16.mxu0 0
  %435 = vmatpush1.bf16.msra.mxu0 0
  %436 = vmatprep.subr.bf16.mxu0 0
  %437 = vmatpush1.bf16.msra.mxu0 0
  %438 = vmatprep.subr.bf16.mxu0 0
  %439 = vmatpush1.bf16.msra.mxu0 0
  %440 = vmatprep.subr.bf16.mxu0 0
  %441 = vmatpush1.bf16.msra.mxu0 0
  %442 = vmatprep.subr.bf16.mxu0 0
  %443 = vmatpush1.bf16.msra.mxu0 0
  %444 = vmatprep.subr.bf16.mxu0 0
  %445 = vmatpush1.bf16.msra.mxu0 0
  %446 = vmatprep.mubr.bf16.mxu0 0
  %447 = vmatmul.mubr.bf16.gmra.mrb[0].mxu0 %v412
  %v448 = vpop.f32.mrb[0].mxu0
  %v449 = vadd.f32 %v409, %v448
  %v450 = vpop.f32.mrb[0].mxu0
  %v451 = vpop.f32.mrb[0].mxu0
  %v452 = vadd.f32 %v409, %v451
  %v453 = vpop.f32.mrb[0].mxu0
  %454 = vdwg.mxu0
  %v455 = vmax.f32 %v449, 0.0
  %v456 = vmax.f32 %v452, 0.0
  %v457 = vld [vmem:[%s3 + $0x60] sm:$0xff]
  %v458 = vld [vmem:[%s3 + $0x68] sm:$0xff]
  %v459 = vpack.c.bf16 %v456, %v455
  %v460 = vpack.c.bf16 %v458, %v457
  %v461 = vld [vmem:[%s3 + $0x70] sm:$0x1]
  %v462 = vlaneseq
  %v463 = vshrl.u32 %v462, 7
  %v464 = vsub.s32 0, %v463
  %v465 = vrot.slane %v461, %v464
  %v467 = vsel %vm410, %v459, 0
  %469 = vmatprep.subr.bf16.mxu0 0
  %470 = vmatpush1.bf16.msra.mxu0 %v460
  %471 = vmatprep.subr.bf16.mxu0 0
  %472 = vmatpush1.bf16.msra.mxu0 0
  %473 = vmatprep.subr.bf16.mxu0 0
  %474 = vmatpush1.bf16.msra.mxu0 0
  %475 = vmatprep.subr.bf16.mxu0 0
  %476 = vmatpush1.bf16.msra.mxu0 0
  %477 = vmatprep.subr.bf16.mxu0 0
  %478 = vmatpush1.bf16.msra.mxu0 0
  %479 = vmatprep.subr.bf16.mxu0 0
  %480 = vmatpush1.bf16.msra.mxu0 0
  %481 = vmatprep.subr.bf16.mxu0 0
  %482 = vmatpush1.bf16.msra.mxu0 0
  %483 = vmatprep.subr.bf16.mxu0 0
  %484 = vmatpush1.bf16.msra.mxu0 0
  %485 = vmatprep.subr.bf16.mxu0 0
  %486 = vmatpush1.bf16.msra.mxu0 0
  %487 = vmatprep.subr.bf16.mxu0 0
  %488 = vmatpush1.bf16.msra.mxu0 0
  %489 = vmatprep.subr.bf16.mxu0 0
  %490 = vmatpush1.bf16.msra.mxu0 0
  %491 = vmatprep.subr.bf16.mxu0 0
  %492 = vmatpush1.bf16.msra.mxu0 0
  %493 = vmatprep.subr.bf16.mxu0 0
  %494 = vmatpush1.bf16.msra.mxu0 0
  %495 = vmatprep.subr.bf16.mxu0 0
  %496 = vmatpush1.bf16.msra.mxu0 0
  %497 = vmatprep.subr.bf16.mxu0 0
  %498 = vmatpush1.bf16.msra.mxu0 0
  %499 = vmatprep.subr.bf16.mxu0 0
  %500 = vmatpush1.bf16.msra.mxu0 0
  %501 = vmatprep.mubr.bf16.mxu0 0
  %502 = vmatmul.mubr.bf16.gmra.mrb[0].mxu0 %v467
  %v503 = vpop.f32.mrb[0].mxu0
  %v504 = vadd.f32 %v465, %v503
  %v505 = vpop.f32.mrb[0].mxu0
  %v506 = vpop.f32.mrb[0].mxu0
  %v507 = vadd.f32 %v465, %v506
  %v508 = vpop.f32.mrb[0].mxu0
  %509 = vdwg.mxu0
  %511 = vset.pattern.permute.xlu0 0
  %512 = vperm.xlu0 %511, %v504
  %v513 = vpop.permute.xlu0 %512
  %516 = vset.pattern.permute.xlu0 0
  %517 = vperm.xlu0 %516, %v507
  %v518 = vpop.permute.xlu0 %517
  %v520 = vmul.f32 %v513, %v333
  %v521 = vmul.f32 %v518, %v334
  %v522 = vmul.f32 %v513, %v129
  %v523 = vmul.f32 %v518, %v130
  %524 = vset.pattern.permute.xlu0 1
  %525 = vperm.xlu0 %524, %v504
  %v526 = vpop.permute.xlu0 %525
  %528 = vset.pattern.permute.xlu0 1
  %529 = vperm.xlu0 %528, %v507
  %v530 = vpop.permute.xlu0 %529
  %v532 = vmul.f32 %v526, %v335
  %v533 = vmul.f32 %v530, %v336
  %v534 = vadd.f32 %v520, %v532
  %v535 = vadd.f32 %v521, %v533
  %v536 = vmul.f32 %v526, %v131
  %v537 = vmul.f32 %v530, %v132
  %v538 = vadd.f32 %v522, %v536
  %v539 = vadd.f32 %v523, %v537
  %540 = vset.pattern.permute.xlu0 2
  %541 = vperm.xlu0 %540, %v504
  %v542 = vpop.permute.xlu0 %541
  %544 = vset.pattern.permute.xlu0 2
  %545 = vperm.xlu0 %544, %v507
  %v546 = vpop.permute.xlu0 %545
  %v548 = vmul.f32 %v542, %v337
  %v549 = vmul.f32 %v546, %v338
  %v550 = vadd.f32 %v534, %v548
  %v551 = vadd.f32 %v535, %v549
  %v552 = vmul.f32 %v542, %v133
  %v553 = vmul.f32 %v546, %v134
  %v554 = vadd.f32 %v538, %v552
  %v555 = vadd.f32 %v539, %v553
  %556 = vset.pattern.permute.xlu0 3
  %557 = vperm.xlu0 %556, %v504
  %v558 = vpop.permute.xlu0 %557
  %560 = vset.pattern.permute.xlu0 3
  %561 = vperm.xlu0 %560, %v507
  %v562 = vpop.permute.xlu0 %561
  %v564 = vmul.f32 %v558, %v339
  %v565 = vmul.f32 %v562, %v340
  %v566 = vadd.f32 %v550, %v564
  %v567 = vadd.f32 %v551, %v565
  %v568 = vmul.f32 %v558, %v135
  %v569 = vmul.f32 %v562, %v136
  %v570 = vadd.f32 %v554, %v568
  %v571 = vadd.f32 %v555, %v569
  %572 = vset.pattern.permute.xlu0 4
  %573 = vperm.xlu0 %572, %v504
  %v574 = vpop.permute.xlu0 %573
  %576 = vset.pattern.permute.xlu0 4
  %577 = vperm.xlu0 %576, %v507
  %v578 = vpop.permute.xlu0 %577
  %v580 = vmul.f32 %v574, %v333
  %v581 = vmul.f32 %v578, %v334
  %v582 = vmul.f32 %v574, %v129
  %v583 = vmul.f32 %v578, %v130
  %584 = vset.pattern.permute.xlu0 5
  %585 = vperm.xlu0 %584, %v504
  %v586 = vpop.permute.xlu0 %585
  %588 = vset.pattern.permute.xlu0 5
  %589 = vperm.xlu0 %588, %v507
  %v590 = vpop.permute.xlu0 %589
  %v592 = vmul.f32 %v586, %v335
  %v593 = vmul.f32 %v590, %v336
  %v594 = vadd.f32 %v580, %v592
  %v595 = vadd.f32 %v581, %v593
  %v596 = vmul.f32 %v586, %v131
  %v597 = vmul.f32 %v590, %v132
  %v598 = vadd.f32 %v582, %v596
  %v599 = vadd.f32 %v583, %v597
  %600 = vset.pattern.permute.xlu0 6
  %601 = vperm.xlu0 %600, %v504
  %v602 = vpop.permute.xlu0 %601
  %604 = vset.pattern.permute.xlu0 6
  %605 = vperm.xlu0 %604, %v507
  %v606 = vpop.permute.xlu0 %605
  %v608 = vmul.f32 %v602, %v337
  %v609 = vmul.f32 %v606, %v338
  %v610 = vadd.f32 %v594, %v608
  %v611 = vadd.f32 %v595, %v609
  %v612 = vmul.f32 %v602, %v133
  %v613 = vmul.f32 %v606, %v134
  %v614 = vadd.f32 %v598, %v612
  %v615 = vadd.f32 %v599, %v613
  %616 = vset.pattern.permute.xlu0 7
  %617 = vperm.xlu0 %616, %v504
  %v618 = vpop.permute.xlu0 %617
  %620 = vset.pattern.permute.xlu0 7
  %621 = vperm.xlu0 %620, %v507
  %v622 = vpop.permute.xlu0 %621
  %v624 = vmul.f32 %v618, %v339
  %v625 = vmul.f32 %v622, %v340
  %v626 = vadd.f32 %v610, %v624
  %v627 = vadd.f32 %v611, %v625
  %v628 = vmul.f32 %v618, %v135
  %v629 = vmul.f32 %v622, %v136
  %v630 = vadd.f32 %v614, %v628
  %v631 = vadd.f32 %v615, %v629
  %632 = vset.pattern.permute.xlu0 8
  %633 = vperm.xlu0 %632, %v504
  %v634 = vpop.permute.xlu0 %633
  %636 = vset.pattern.permute.xlu0 8
  %637 = vperm.xlu0 %636, %v507
  %v638 = vpop.permute.xlu0 %637
  %v640 = vmul.f32 %v634, %v333
  %v641 = vmul.f32 %v638, %v334
  %v642 = vmul.f32 %v634, %v129
  %v643 = vmul.f32 %v638, %v130
  %644 = vset.pattern.permute.xlu0 9
  %645 = vperm.xlu0 %644, %v504
  %v646 = vpop.permute.xlu0 %645
  %648 = vset.pattern.permute.xlu0 9
  %649 = vperm.xlu0 %648, %v507
  %v650 = vpop.permute.xlu0 %649
  %v652 = vmul.f32 %v646, %v335
  %v653 = vmul.f32 %v650, %v336
  %v654 = vadd.f32 %v640, %v652
  %v655 = vadd.f32 %v641, %v653
  %v656 = vmul.f32 %v646, %v131
  %v657 = vmul.f32 %v650, %v132
  %v658 = vadd.f32 %v642, %v656
  %v659 = vadd.f32 %v643, %v657
  %660 = vset.pattern.permute.xlu0 10
  %661 = vperm.xlu0 %660, %v504
  %v662 = vpop.permute.xlu0 %661
  %664 = vset.pattern.permute.xlu0 10
  %665 = vperm.xlu0 %664, %v507
  %v666 = vpop.permute.xlu0 %665
  %v668 = vmul.f32 %v662, %v337
  %v669 = vmul.f32 %v666, %v338
  %v670 = vadd.f32 %v654, %v668
  %v671 = vadd.f32 %v655, %v669
  %v672 = vmul.f32 %v662, %v133
  %v673 = vmul.f32 %v666, %v134
  %v674 = vadd.f32 %v658, %v672
  %v675 = vadd.f32 %v659, %v673
  %676 = vset.pattern.permute.xlu0 11
  %677 = vperm.xlu0 %676, %v504
  %v678 = vpop.permute.xlu0 %677
  %680 = vset.pattern.permute.xlu0 11
  %681 = vperm.xlu0 %680, %v507
  %v682 = vpop.permute.xlu0 %681
  %v684 = vmul.f32 %v678, %v339
  %v685 = vmul.f32 %v682, %v340
  %v686 = vadd.f32 %v670, %v684
  %v687 = vadd.f32 %v671, %v685
  %v688 = vmul.f32 %v678, %v135
  %v689 = vmul.f32 %v682, %v136
  %v690 = vadd.f32 %v674, %v688
  %v691 = vadd.f32 %v675, %v689
  %692 = vset.pattern.permute.xlu0 12
  %693 = vperm.xlu0 %692, %v504
  %v694 = vpop.permute.xlu0 %693
  %696 = vset.pattern.permute.xlu0 12
  %697 = vperm.xlu0 %696, %v507
  %v698 = vpop.permute.xlu0 %697
  %v700 = vmul.f32 %v694, %v333
  %v701 = vmul.f32 %v698, %v334
  %v702 = vmul.f32 %v694, %v129
  %v703 = vmul.f32 %v698, %v130
  %704 = vset.pattern.permute.xlu0 13
  %705 = vperm.xlu0 %704, %v504
  %v706 = vpop.permute.xlu0 %705
  %708 = vset.pattern.permute.xlu0 13
  %709 = vperm.xlu0 %708, %v507
  %v710 = vpop.permute.xlu0 %709
  %v712 = vmul.f32 %v706, %v335
  %v713 = vmul.f32 %v710, %v336
  %v714 = vadd.f32 %v700, %v712
  %v715 = vadd.f32 %v701, %v713
  %v716 = vmul.f32 %v706, %v131
  %v717 = vmul.f32 %v710, %v132
  %v718 = vadd.f32 %v702, %v716
  %v719 = vadd.f32 %v703, %v717
  %720 = vset.pattern.permute.xlu0 14
  %721 = vperm.xlu0 %720, %v504
  %v722 = vpop.permute.xlu0 %721
  %724 = vset.pattern.permute.xlu0 14
  %725 = vperm.xlu0 %724, %v507
  %v726 = vpop.permute.xlu0 %725
  %v728 = vmul.f32 %v722, %v337
  %v729 = vmul.f32 %v726, %v338
  %v730 = vadd.f32 %v714, %v728
  %v731 = vadd.f32 %v715, %v729
  %v732 = vmul.f32 %v722, %v133
  %v733 = vmul.f32 %v726, %v134
  %v734 = vadd.f32 %v718, %v732
  %v735 = vadd.f32 %v719, %v733
  %736 = vset.pattern.permute.xlu0 15
  %737 = vperm.xlu0 %736, %v504
  %v738 = vpop.permute.xlu0 %737
  %740 = vset.pattern.permute.xlu0 15
  %741 = vperm.xlu0 %740, %v507
  %v742 = vpop.permute.xlu0 %741
  %v744 = vmul.f32 %v738, %v339
  %v745 = vmul.f32 %v742, %v340
  %v746 = vadd.f32 %v730, %v744
  %v747 = vadd.f32 %v731, %v745
  %v748 = vmul.f32 %v738, %v135
  %v749 = vmul.f32 %v742, %v136
  %v750 = vadd.f32 %v734, %v748
  %v751 = vadd.f32 %v735, %v749
  %v752 = vld [vmem:[%s3 + $0x78] sm:$0xff]
  %v753 = vld [vmem:[%s3 + $0x80] sm:$0xff]
  %v754 = vld [vmem:[%s3 + $0x88] sm:$0x3]
  %v755 = vld [vmem:[%s3 + $0x90] sm:$0x3]
  %v756 = vlaneseq
  %v757 = vshrl.u32 %v756, 7
  %v758 = vsub.s32 0, %v757
  %v759 = vrot.slane %v752, %v758
  %v760 = vmul.f32 %v759, %v566
  %v761 = vmul.f32 %v759, %v567
  %v762 = vlaneseq
  %v763 = vshrl.u32 %v762, 7
  %v764 = vsub.s32 0, %v763
  %v765 = vrot.slane %v754, %v764
  %v766 = vadd.f32 %v765, %v760
  %v767 = vadd.f32 %v765, %v761
  %v768 = vlaneseq
  %v769 = vshrl.u32 %v768, 7
  %v770 = vsub.s32 0, %v769
  %v771 = vrot.slane %v753, %v770
  %v772 = vmul.f32 %v771, %v570
  %v773 = vmul.f32 %v771, %v571
  %v774 = vlaneseq
  %v775 = vshrl.u32 %v774, 7
  %v776 = vsub.s32 0, %v775
  %v777 = vrot.slane %v755, %v776
  %v778 = vadd.f32 %v777, %v772
  %v779 = vadd.f32 %v777, %v773
  %v780 = vlaneseq
  %v781 = vshrl.u32 %v780, 7
  %v782 = vsub.s32 1, %v781
  %v783 = vrot.slane %v752, %v782
  %v784 = vmul.f32 %v783, %v626
  %v785 = vmul.f32 %v783, %v627
  %v786 = vadd.f32 %v766, %v784
  %v787 = vadd.f32 %v767, %v785
  %v788 = vlaneseq
  %v789 = vshrl.u32 %v788, 7
  %v790 = vsub.s32 1, %v789
  %v791 = vrot.slane %v753, %v790
  %v792 = vmul.f32 %v791, %v630
  %v793 = vmul.f32 %v791, %v631
  %v794 = vadd.f32 %v778, %v792
  %v795 = vadd.f32 %v779, %v793
  %v796 = vlaneseq
  %v797 = vshrl.u32 %v796, 7
  %v798 = vsub.s32 2, %v797
  %v799 = vrot.slane %v752, %v798
  %v800 = vmul.f32 %v799, %v686
  %v801 = vmul.f32 %v799, %v687
  %v802 = vadd.f32 %v786, %v800
  %v803 = vadd.f32 %v787, %v801
  %v804 = vlaneseq
  %v805 = vshrl.u32 %v804, 7
  %v806 = vsub.s32 2, %v805
  %v807 = vrot.slane %v753, %v806
  %v808 = vmul.f32 %v807, %v690
  %v809 = vmul.f32 %v807, %v691
  %v810 = vadd.f32 %v794, %v808
  %v811 = vadd.f32 %v795, %v809
  %v812 = vlaneseq
  %v813 = vshrl.u32 %v812, 7
  %v814 = vsub.s32 3, %v813
  %v815 = vrot.slane %v752, %v814
  %v816 = vmul.f32 %v815, %v746
  %v817 = vmul.f32 %v815, %v747
  %v818 = vadd.f32 %v802, %v816
  %v819 = vadd.f32 %v803, %v817
  %v820 = vlaneseq
  %v821 = vshrl.u32 %v820, 7
  %v822 = vsub.s32 3, %v821
  %v823 = vrot.slane %v753, %v822
  %v824 = vmul.f32 %v823, %v750
  %v825 = vmul.f32 %v823, %v751
  %v826 = vadd.f32 %v810, %v824
  %v827 = vadd.f32 %v811, %v825
  %v828 = vld [vmem:[%s3 + $0x98] sm:$0xf]
  %v829 = vpack.c.bf16 %v819, %v818
  %v830 = vpack.c.bf16 %v828, %v828
  %v831 = vld [vmem:[%s3 + $0xa0] sm:$0xff]
  %v832 = vpack.c.bf16 %v827, %v826
  %v833 = vpack.c.bf16 %v831, %v831
  %v835 = vsel %vm47, %v832, 0
  %v838 = vsel %vm60, %v833, 0
  %840 = vmatprep.subr.bf16.mxu0 0
  %841 = vmatpush1.bf16.msra.mxu0 %v838
  %842 = vmatprep.subr.bf16.mxu0 0
  %843 = vmatpush1.bf16.msra.mxu0 0
  %844 = vmatprep.subr.bf16.mxu0 0
  %845 = vmatpush1.bf16.msra.mxu0 0
  %846 = vmatprep.subr.bf16.mxu0 0
  %847 = vmatpush1.bf16.msra.mxu0 0
  %848 = vmatprep.subr.bf16.mxu0 0
  %849 = vmatpush1.bf16.msra.mxu0 0
  %850 = vmatprep.subr.bf16.mxu0 0
  %851 = vmatpush1.bf16.msra.mxu0 0
  %852 = vmatprep.subr.bf16.mxu0 0
  %853 = vmatpush1.bf16.msra.mxu0 0
  %854 = vmatprep.subr.bf16.mxu0 0
  %855 = vmatpush1.bf16.msra.mxu0 0
  %856 = vmatprep.subr.bf16.mxu0 0
  %857 = vmatpush1.bf16.msra.mxu0 0
  %858 = vmatprep.subr.bf16.mxu0 0
  %859 = vmatpush1.bf16.msra.mxu0 0
  %860 = vmatprep.subr.bf16.mxu0 0
  %861 = vmatpush1.bf16.msra.mxu0 0
  %862 = vmatprep.subr.bf16.mxu0 0
  %863 = vmatpush1.bf16.msra.mxu0 0
  %864 = vmatprep.subr.bf16.mxu0 0
  %865 = vmatpush1.bf16.msra.mxu0 0
  %866 = vmatprep.subr.bf16.mxu0 0
  %867 = vmatpush1.bf16.msra.mxu0 0
  %868 = vmatprep.subr.bf16.mxu0 0
  %869 = vmatpush1.bf16.msra.mxu0 0
  %870 = vmatprep.subr.bf16.mxu0 0
  %871 = vmatpush1.bf16.msra.mxu0 0
  %872 = vmatprep.mubr.bf16.mxu0 0
  %873 = vmatmul.mubr.bf16.gmra.mrb[0].mxu0 %v835
  %v874 = vpop.f32.mrb[0].mxu0
  %v875 = vadd.f32 0.0, %v874
  %v876 = vpop.f32.mrb[0].mxu0
  %v877 = vpop.f32.mrb[0].mxu0
  %v878 = vadd.f32 0.0, %v877
  %v879 = vpop.f32.mrb[0].mxu0
  %880 = vdwg.mxu0
  %v881 = vlaneseq
  %v882 = vshrl.u32 %v881, 7
  %v883 = vsub.s32 4, %v882
  %v884 = vrot.slane %v752, %v883
  %v885 = vmul.f32 %v884, %v566
  %v886 = vmul.f32 %v884, %v567
  %v887 = vlaneseq
  %v888 = vshrl.u32 %v887, 7
  %v889 = vsub.s32 1, %v888
  %v890 = vrot.slane %v754, %v889
  %v891 = vadd.f32 %v890, %v885
  %v892 = vadd.f32 %v890, %v886
  %v893 = vlaneseq
  %v894 = vshrl.u32 %v893, 7
  %v895 = vsub.s32 4, %v894
  %v896 = vrot.slane %v753, %v895
  %v897 = vmul.f32 %v896, %v570
  %v898 = vmul.f32 %v896, %v571
  %v899 = vlaneseq
  %v900 = vshrl.u32 %v899, 7
  %v901 = vsub.s32 1, %v900
  %v902 = vrot.slane %v755, %v901
  %v903 = vadd.f32 %v902, %v897
  %v904 = vadd.f32 %v902, %v898
  %v905 = vlaneseq
  %v906 = vshrl.u32 %v905, 7
  %v907 = vsub.s32 5, %v906
  %v908 = vrot.slane %v752, %v907
  %v909 = vmul.f32 %v908, %v626
  %v910 = vmul.f32 %v908, %v627
  %v911 = vadd.f32 %v891, %v909
  %v912 = vadd.f32 %v892, %v910
  %v913 = vlaneseq
  %v914 = vshrl.u32 %v913, 7
  %v915 = vsub.s32 5, %v914
  %v916 = vrot.slane %v753, %v915
  %v917 = vmul.f32 %v916, %v630
  %v918 = vmul.f32 %v916, %v631
  %v919 = vadd.f32 %v903, %v917
  %v920 = vadd.f32 %v904, %v918
  %v921 = vlaneseq
  %v922 = vshrl.u32 %v921, 7
  %v923 = vsub.s32 6, %v922
  %v924 = vrot.slane %v752, %v923
  %v925 = vmul.f32 %v924, %v686
  %v926 = vmul.f32 %v924, %v687
  %v927 = vadd.f32 %v911, %v925
  %v928 = vadd.f32 %v912, %v926
  %v929 = vlaneseq
  %v930 = vshrl.u32 %v929, 7
  %v931 = vsub.s32 6, %v930
  %v932 = vrot.slane %v753, %v931
  %v933 = vmul.f32 %v932, %v690
  %v934 = vmul.f32 %v932, %v691
  %v935 = vadd.f32 %v919, %v933
  %v936 = vadd.f32 %v920, %v934
  %v937 = vlaneseq
  %v938 = vshrl.u32 %v937, 7
  %v939 = vsub.s32 7, %v938
  %v940 = vrot.slane %v752, %v939
  %v941 = vmul.f32 %v940, %v746
  %v942 = vmul.f32 %v940, %v747
  %v943 = vadd.f32 %v927, %v941
  %v944 = vadd.f32 %v928, %v942
  %v945 = vlaneseq
  %v946 = vshrl.u32 %v945, 7
  %v947 = vsub.s32 7, %v946
  %v948 = vrot.slane %v753, %v947
  %v949 = vmul.f32 %v948, %v750
  %v950 = vmul.f32 %v948, %v751
  %v951 = vadd.f32 %v935, %v949
  %v952 = vadd.f32 %v936, %v950
  %v953 = vld [vmem:[%s3 + $0xa8] sm:$0xf]
  %v954 = vpack.c.bf16 %v944, %v943
  %v955 = vpack.c.bf16 %v953, %v953
  %v957 = vsel %vm252, %v954, 0
  %v960 = vsel %vm162, %v955, 0
  %962 = vmatprep.subr.bf16.mxu0 0
  %963 = vmatpush1.bf16.msra.mxu0 %v960
  %964 = vmatprep.subr.bf16.mxu0 0
  %965 = vmatpush1.bf16.msra.mxu0 0
  %966 = vmatprep.subr.bf16.mxu0 0
  %967 = vmatpush1.bf16.msra.mxu0 0
  %968 = vmatprep.subr.bf16.mxu0 0
  %969 = vmatpush1.bf16.msra.mxu0 0
  %970 = vmatprep.subr.bf16.mxu0 0
  %971 = vmatpush1.bf16.msra.mxu0 0
  %972 = vmatprep.subr.bf16.mxu0 0
  %973 = vmatpush1.bf16.msra.mxu0 0
  %974 = vmatprep.subr.bf16.mxu0 0
  %975 = vmatpush1.bf16.msra.mxu0 0
  %976 = vmatprep.subr.bf16.mxu0 0
  %977 = vmatpush1.bf16.msra.mxu0 0
  %978 = vmatprep.subr.bf16.mxu0 0
  %979 = vmatpush1.bf16.msra.mxu0 0
  %980 = vmatprep.subr.bf16.mxu0 0
  %981 = vmatpush1.bf16.msra.mxu0 0
  %982 = vmatprep.subr.bf16.mxu0 0
  %983 = vmatpush1.bf16.msra.mxu0 0
  %984 = vmatprep.subr.bf16.mxu0 0
  %985 = vmatpush1.bf16.msra.mxu0 0
  %986 = vmatprep.subr.bf16.mxu0 0
  %987 = vmatpush1.bf16.msra.mxu0 0
  %988 = vmatprep.subr.bf16.mxu0 0
  %989 = vmatpush1.bf16.msra.mxu0 0
  %990 = vmatprep.subr.bf16.mxu0 0
  %991 = vmatpush1.bf16.msra.mxu0 0
  %992 = vmatprep.subr.bf16.mxu0 0
  %993 = vmatpush1.bf16.msra.mxu0 0
  %994 = vmatprep.mubr.bf16.mxu0 0
  %995 = vmatmul.mubr.bf16.gmra.mrb[0].mxu0 %v957
  %v996 = vpop.f32.mrb[0].mxu0
  %v997 = vadd.f32 0.0, %v996
  %v998 = vpop.f32.mrb[0].mxu0
  %v999 = vpop.f32.mrb[0].mxu0
  %v1000 = vadd.f32 0.0, %v999
  %v1001 = vpop.f32.mrb[0].mxu0
  %1002 = vdwg.mxu0
  %v1003 = vld [vmem:[%s3 + $0xb0] sm:$0xff]
  %v1004 = vpack.c.bf16 %v952, %v951
  %v1005 = vpack.c.bf16 %v1003, %v1003
  %v1007 = vsel %vm47, %v1004, 0
  %v1010 = vsel %vm60, %v1005, 0
  %1012 = vmatprep.subr.bf16.mxu0 0
  %1013 = vmatpush1.bf16.msra.mxu0 %v1010
  %1014 = vmatprep.subr.bf16.mxu0 0
  %1015 = vmatpush1.bf16.msra.mxu0 0
  %1016 = vmatprep.subr.bf16.mxu0 0
  %1017 = vmatpush1.bf16.msra.mxu0 0
  %1018 = vmatprep.subr.bf16.mxu0 0
  %1019 = vmatpush1.bf16.msra.mxu0 0
  %1020 = vmatprep.subr.bf16.mxu0 0
  %1021 = vmatpush1.bf16.msra.mxu0 0
  %1022 = vmatprep.subr.bf16.mxu0 0
  %1023 = vmatpush1.bf16.msra.mxu0 0
  %1024 = vmatprep.subr.bf16.mxu0 0
  %1025 = vmatpush1.bf16.msra.mxu0 0
  %1026 = vmatprep.subr.bf16.mxu0 0
  %1027 = vmatpush1.bf16.msra.mxu0 0
  %1028 = vmatprep.subr.bf16.mxu0 0
  %1029 = vmatpush1.bf16.msra.mxu0 0
  %1030 = vmatprep.subr.bf16.mxu0 0
  %1031 = vmatpush1.bf16.msra.mxu0 0
  %1032 = vmatprep.subr.bf16.mxu0 0
  %1033 = vmatpush1.bf16.msra.mxu0 0
  %1034 = vmatprep.subr.bf16.mxu0 0
  %1035 = vmatpush1.bf16.msra.mxu0 0
  %1036 = vmatprep.subr.bf16.mxu0 0
  %1037 = vmatpush1.bf16.msra.mxu0 0
  %1038 = vmatprep.subr.bf16.mxu0 0
  %1039 = vmatpush1.bf16.msra.mxu0 0
  %1040 = vmatprep.subr.bf16.mxu0 0
  %1041 = vmatpush1.bf16.msra.mxu0 0
  %1042 = vmatprep.subr.bf16.mxu0 0
  %1043 = vmatpush1.bf16.msra.mxu0 0
  %1044 = vmatprep.mubr.bf16.mxu0 0
  %1045 = vmatmul.mubr.bf16.gmra.mrb[0].mxu0 %v1007
  %v1046 = vpop.f32.mrb[0].mxu0
  %v1047 = vadd.f32 0.0, %v1046
  %v1048 = vpop.f32.mrb[0].mxu0
  %v1049 = vpop.f32.mrb[0].mxu0
  %v1050 = vadd.f32 0.0, %v1049
  %v1051 = vpop.f32.mrb[0].mxu0
  %1052 = vdwg.mxu0
  %v1054 = vsel %vm252, %v829, 0
  %v1057 = vsel %vm162, %v830, 0
  %1059 = vmatprep.subr.bf16.mxu0 0
  %1060 = vmatpush1.bf16.msra.mxu0 %v1057
  %1061 = vmatprep.subr.bf16.mxu0 0
  %1062 = vmatpush1.bf16.msra.mxu0 0
  %1063 = vmatprep.subr.bf16.mxu0 0
  %1064 = vmatpush1.bf16.msra.mxu0 0
  %1065 = vmatprep.subr.bf16.mxu0 0
  %1066 = vmatpush1.bf16.msra.mxu0 0
  %1067 = vmatprep.subr.bf16.mxu0 0
  %1068 = vmatpush1.bf16.msra.mxu0 0
  %1069 = vmatprep.subr.bf16.mxu0 0
  %1070 = vmatpush1.bf16.msra.mxu0 0
  %1071 = vmatprep.subr.bf16.mxu0 0
  %1072 = vmatpush1.bf16.msra.mxu0 0
  %1073 = vmatprep.subr.bf16.mxu0 0
  %1074 = vmatpush1.bf16.msra.mxu0 0
  %1075 = vmatprep.subr.bf16.mxu0 0
  %1076 = vmatpush1.bf16.msra.mxu0 0
  %1077 = vmatprep.subr.bf16.mxu0 0
  %1078 = vmatpush1.bf16.msra.mxu0 0
  %1079 = vmatprep.subr.bf16.mxu0 0
  %1080 = vmatpush1.bf16.msra.mxu0 0
  %1081 = vmatprep.subr.bf16.mxu0 0
  %1082 = vmatpush1.bf16.msra.mxu0 0
  %1083 = vmatprep.subr.bf16.mxu0 0
  %1084 = vmatpush1.bf16.msra.mxu0 0
  %1085 = vmatprep.subr.bf16.mxu0 0
  %1086 = vmatpush1.bf16.msra.mxu0 0
  %1087 = vmatprep.subr.bf16.mxu0 0
  %1088 = vmatpush1.bf16.msra.mxu0 0
  %1089 = vmatprep.subr.bf16.mxu0 0
  %1090 = vmatpush1.bf16.msra.mxu0 0
  %1091 = vmatprep.mubr.bf16.mxu0 0
  %1092 = vmatmul.mubr.bf16.gmra.mrb[0].mxu0 %v1054
  %v1093 = vpop.f32.mrb[0].mxu0
  %v1094 = vadd.f32 %v875, %v1093
  %v1095 = vpop.f32.mrb[0].mxu0
  %v1096 = vpop.f32.mrb[0].mxu0
  %v1097 = vadd.f32 %v878, %v1096
  %v1098 = vpop.f32.mrb[0].mxu0
  %1099 = vdwg.mxu0
  %v1100 = vadd.f32 %v1094, %v997
  %v1101 = vadd.f32 %v1097, %v1000
  %v1102 = vadd.f32 %v1100, %v1047
  %v1103 = vadd.f32 %v1101, %v1050
  %v1104 = vmax.f32 %v1102, 0.0
  %v1105 = vmax.f32 %v1103, 0.0
  %1106 = vst [vmem:[%s4] sm:$0xff] %v1104
  %1107 = vst [vmem:[%s4 + $0x8] sm:$0xff] %v1105
  // Predicated region
  $region18: #{pointcnn_forward.1} parent=0 // pred_check
    _
  $region19: #{pointcnn_forward.1} parent=0 // pred_check_branch
    %1109 = sbr.rel (0) target = $region21
  $region20: #{pointcnn_forward.1} parent=0 // pred_region
    _
  $region21: #{pointcnn_forward.1} parent=0 // pred_fallthru
    _
  // Predicated region
  $region22: #{pointcnn_forward.1} parent=0 // pred_check
    _
  $region23: #{pointcnn_forward.1} parent=0 // pred_check_branch
    %1111 = sbr.rel (0) target = $region25
  $region24: #{pointcnn_forward.1} parent=0 // pred_region
    _
  $region25: #{pointcnn_forward.1} parent=0 // pred_fallthru
    _

</llo_original>
